<compile_context>
chip_gen: v5e
topology: v5e:2x2
jax: 0.10.0
libtpu: 0.0.40
codegen_flags: <defaults>
</compile_context>

<pallas_src>
import functools

import jax
import jax.numpy as jnp
from jax.experimental import pallas as pl
from jax.experimental.pallas import tpu as pltpu


# Tile sizes: conservative for every generation (v5e/v6e/v7x).  Per grid step the
# resident VMEM is ~0.7 MiB (double-buffered), far under the 48 MiB budget below,
# and both tiles are multiples of 128 so they map cleanly onto 128- and 256-wide MXUs.
TM = 256      # destination-row tile
TK = 256      # source-node (reduction) tile
LANE = 128    # lane width / MXU-friendly padding unit
VMEM_LIMIT = 48 * 1024 * 1024


def _round_up(x, m):
    return ((x + m - 1) // m) * m


def _pad2(a, rows, cols):
    return jnp.pad(a, ((0, rows - a.shape[0]), (0, cols - a.shape[1])))


# ----------------------------------------------------------------------------
# Kernel 1: fused dual projection   P = X @ W_l (bf16),  S = X @ W_r + b (f32)
# ----------------------------------------------------------------------------
def _dual_proj_kernel(x_ref, wl_ref, wr_ref, b_ref, p_ref, s_ref):
    x = x_ref[...]
    p_ref[...] = jnp.dot(x, wl_ref[...],
                         preferred_element_type=jnp.float32).astype(p_ref.dtype)
    s_ref[...] = (jnp.dot(x, wr_ref[...], preferred_element_type=jnp.float32)
                  + b_ref[...])


def project(x_pad, w_l, w_r, b):
    """x_pad: [N_pad, C_pad] f32, w_l/w_r: [C_pad, H_pad] f32, b: [1, H_pad] f32."""
    n_pad, c_pad = x_pad.shape
    h_pad = w_l.shape[1]
    return pl.pallas_call(
        _dual_proj_kernel,
        out_shape=(jax.ShapeDtypeStruct((n_pad, h_pad), jnp.bfloat16),
                   jax.ShapeDtypeStruct((n_pad, h_pad), jnp.float32)),
        grid_spec=pltpu.PrefetchScalarGridSpec(
            num_scalar_prefetch=0,
            grid=(n_pad // TM,),
            in_specs=[
                pl.BlockSpec((TM, c_pad), lambda i: (i, 0)),
                pl.BlockSpec((c_pad, h_pad), lambda i: (0, 0)),
                pl.BlockSpec((c_pad, h_pad), lambda i: (0, 0)),
                pl.BlockSpec((1, h_pad), lambda i: (0, 0)),
            ],
            out_specs=(pl.BlockSpec((TM, h_pad), lambda i: (i, 0)),
                       pl.BlockSpec((TM, h_pad), lambda i: (i, 0))),
        ),
        compiler_params=pltpu.CompilerParams(
            dimension_semantics=("parallel",),
            vmem_limit_bytes=VMEM_LIMIT,
        ),
    )(x_pad, w_l, w_r, b)


# ----------------------------------------------------------------------------
# Kernel 2: tiled aggregation   out = A @ P + S  (+ ReLU | masked log_softmax)
# ----------------------------------------------------------------------------
def _make_aggregate_kernel(apply_relu: bool, apply_log_softmax: bool, valid_out: int):
    def kernel(a_ref, p_ref, s_ref, o_ref, acc_ref):
        k = pl.program_id(1)

        @pl.when(k == 0)
        def _():
            acc_ref[...] = jnp.zeros_like(acc_ref)

        # bf16 x bf16 -> f32 accumulation on the MXU
        acc_ref[...] += jnp.dot(a_ref[...], p_ref[...],
                                preferred_element_type=jnp.float32)

        @pl.when(k == pl.num_programs(1) - 1)
        def _():
            h = acc_ref[...] + s_ref[...]            # add self path + bias once
            if apply_relu:
                h = jnp.maximum(h, 0.0)
            if apply_log_softmax:
                if valid_out < h.shape[-1]:
                    col = jax.lax.broadcasted_iota(jnp.int32, h.shape, 1)
                    h = jnp.where(col < valid_out, h, -jnp.inf)
                m = jnp.max(h, axis=-1, keepdims=True)
                z = h - m
                lse = jnp.log(jnp.sum(jnp.exp(z), axis=-1, keepdims=True))
                h = z - lse
            o_ref[...] = h

    return kernel


def aggregate(A_pad, P, S, *, relu, log_softmax, valid_out):
    """A_pad: [N_pad, N_pad] bf16, P: [N_pad, H_pad] bf16, S: [N_pad, H_pad] f32."""
    n_pad = A_pad.shape[0]
    h_pad = P.shape[1]
    kernel = _make_aggregate_kernel(relu, log_softmax, valid_out)
    return pl.pallas_call(
        kernel,
        out_shape=jax.ShapeDtypeStruct((n_pad, h_pad), jnp.float32),
        grid_spec=pltpu.PrefetchScalarGridSpec(
            num_scalar_prefetch=0,
            grid=(n_pad // TM, n_pad // TK),
            in_specs=[
                pl.BlockSpec((TM, TK), lambda i, k: (i, k)),     # A tile
                pl.BlockSpec((TK, h_pad), lambda i, k: (k, 0)),  # projected neighbors
                pl.BlockSpec((TM, h_pad), lambda i, k: (i, 0)),  # self path (resident)
            ],
            out_specs=pl.BlockSpec((TM, h_pad), lambda i, k: (i, 0)),
            scratch_shapes=[pltpu.VMEM((TM, h_pad), jnp.float32)],
        ),
        compiler_params=pltpu.CompilerParams(
            dimension_semantics=("parallel", "arbitrary"),
            vmem_limit_bytes=VMEM_LIMIT,
        ),
    )(A_pad, P, S)


# ----------------------------------------------------------------------------
# Plain-JAX glue
# ----------------------------------------------------------------------------
def build_mean_adj(edge_index, num_nodes, n_pad):
    """Row-normalized dense adjacency (bf16, zero-padded to [n_pad, n_pad]).
    A[i, j] = 1/deg_in(i) for each edge j -> i; isolated targets get zero rows."""
    src, dst = edge_index[0], edge_index[1]
    A = jnp.zeros((num_nodes, num_nodes), jnp.float32).at[dst, src].add(1.0)
    deg = A.sum(axis=1, keepdims=True)
    A = jnp.where(deg > 0, A / jnp.where(deg > 0, deg, 1.0), 0.0)
    return _pad2(A.astype(jnp.bfloat16), n_pad, n_pad)


@functools.partial(jax.jit, static_argnames=("num_nodes",))
def net_forward(x, edge_index, params, *, num_nodes):
    in_c = x.shape[1]
    hidden = params["w_l1"].shape[1]
    out_c = params["w_l2"].shape[1]

    n_pad = _round_up(max(num_nodes, TM), max(TM, TK))
    c_pad = _round_up(in_c, LANE)
    h_pad = _round_up(hidden, LANE)
    o_pad = _round_up(out_c, LANE)

    A_pad = build_mean_adj(edge_index, num_nodes, n_pad)
    x_pad = _pad2(x, n_pad, c_pad)

    w_l1 = _pad2(params["w_l1"], c_pad, h_pad)
    w_r1 = _pad2(params["w_r1"], c_pad, h_pad)
    b_l1 = _pad2(params["b_l1"], 1, h_pad)
    w_l2 = _pad2(params["w_l2"], h_pad, o_pad)
    w_r2 = _pad2(params["w_r2"], h_pad, o_pad)
    b_l2 = _pad2(params["b_l2"], 1, o_pad)

    # Layer 1: SAGEConv(in, 128) + ReLU  (eval-mode dropout = identity)
    P1, S1 = project(x_pad, w_l1, w_r1, b_l1)
    h1 = aggregate(A_pad, P1, S1, relu=True, log_softmax=False, valid_out=h_pad)

    # Layer 2: SAGEConv(128, out) + log_softmax over the valid out_c lanes
    P2, S2 = project(h1, w_l2, w_r2, b_l2)
    out = aggregate(A_pad, P2, S2, relu=False, log_softmax=True, valid_out=out_c)

    return out[:num_nodes, :out_c]


# ----------------------------------------------------------------------------
# Reference (pure JAX, f32) and parameter init
# ----------------------------------------------------------------------------
def reference_forward(x, edge_index, params, num_nodes):
    src, dst = edge_index[0], edge_index[1]
    A = jnp.zeros((num_nodes, num_nodes), jnp.float32).at[dst, src].add(1.0)
    deg = A.sum(axis=1, keepdims=True)
    A = jnp.where(deg > 0, A / jnp.where(deg > 0, deg, 1.0), 0.0)
    h = A @ (x @ params["w_l1"]) + x @ params["w_r1"] + params["b_l1"]
    h = jnp.maximum(h, 0.0)
    o = A @ (h @ params["w_l2"]) + h @ params["w_r2"] + params["b_l2"]
    return jax.nn.log_softmax(o, axis=-1)


def init_params(key, in_channels, hidden, out_channels):
    k1, k2, k3, k4 = jax.random.split(key, 4)

    def glorot(k, fan_in, fan_out):
        lim = (6.0 / (fan_in + fan_out)) ** 0.5
        return jax.random.uniform(k, (fan_in, fan_out), jnp.float32, -lim, lim)

    return {
        "w_l1": glorot(k1, in_channels, hidden),
        "w_r1": glorot(k2, in_channels, hidden),
        "b_l1": jnp.zeros((1, hidden), jnp.float32),
        "w_l2": glorot(k3, hidden, out_channels),
        "w_r2": glorot(k4, hidden, out_channels),
        "b_l2": jnp.zeros((1, out_channels), jnp.float32),
    }


if __name__ == "__main__":
    N = 16            # nodes
    E = 48            # edges
    IN_C = 32         # in_channels
    HIDDEN = 128      # fixed by the module
    OUT_C = 8         # out_channels

    key = jax.random.PRNGKey(0)
    kx, ke_src, ke_dst, kp = jax.random.split(key, 4)

    x = jax.random.normal(kx, (N, IN_C), jnp.float32)
    edge_index = jnp.stack([
        jax.random.randint(ke_src, (E,), 0, N, dtype=jnp.int32),
        jax.random.randint(ke_dst, (E,), 0, N, dtype=jnp.int32),
    ], axis=0)                                             # [2, E]

    params = init_params(kp, IN_C, HIDDEN, OUT_C)

    out = net_forward(x, edge_index, params, num_nodes=N)
    out = jax.block_until_ready(out)

    assert out.shape == (N, OUT_C), out.shape
    assert bool(jnp.all(jnp.isfinite(out)))
    # log_softmax rows must (approximately) logsumexp to 0
    row_lse = jax.scipy.special.logsumexp(out, axis=-1)
    assert bool(jnp.all(jnp.abs(row_lse) < 1e-3)), row_lse
    # compare against f32 pure-JAX reference (loose tolerance: A/P streamed in bf16)
    ref = reference_forward(x, edge_index, params, N)
    max_err = float(jnp.max(jnp.abs(out - ref)))
    assert max_err < 0.15, max_err

    print("KERNEL_OK")
</pallas_src>

<mosaic_0001>
module attributes {stable_mosaic.version = 11 : i64} {
  func.func @_dual_proj_kernel(%arg0: i32, %arg1: memref<256x128xf32, #tpu.memory_space<vmem>>, %arg2: memref<128x128xf32, #tpu.memory_space<vmem>>, %arg3: memref<128x128xf32, #tpu.memory_space<vmem>>, %arg4: memref<1x128xf32, #tpu.memory_space<vmem>>, %arg5: memref<256x128xbf16, #tpu.memory_space<vmem>>, %arg6: memref<256x128xf32, #tpu.memory_space<vmem>>) attributes {dimension_semantics = [#tpu.dimension_semantics<parallel>], iteration_bounds = array<i64: 1>, scalar_prefetch = 0 : i64, scratch_operands = 0 : i64, tpu.core_type = #tpu.core_type<tc>, window_params = [{transform_indices = @transform_0, window_bounds = array<i64: 256, 128>}, {pipeline_mode = #tpu.pipeline_mode<synchronous>, transform_indices = @transform_1, window_bounds = array<i64: 128, 128>}, {pipeline_mode = #tpu.pipeline_mode<synchronous>, transform_indices = @transform_2, window_bounds = array<i64: 128, 128>}, {pipeline_mode = #tpu.pipeline_mode<synchronous>, transform_indices = @transform_3, window_bounds = array<i64: 1, 128>}, {transform_indices = @transform_4, window_bounds = array<i64: 256, 128>}, {transform_indices = @transform_5, window_bounds = array<i64: 256, 128>}]} {
    %c0 = arith.constant 0 : index
    %c0_0 = arith.constant 0 : index
    %0 = vector.load %arg1[%c0, %c0_0] : memref<256x128xf32, #tpu.memory_space<vmem>>, vector<256x128xf32>
    %c0_1 = arith.constant 0 : index
    %c0_2 = arith.constant 0 : index
    %1 = vector.load %arg2[%c0_1, %c0_2] : memref<128x128xf32, #tpu.memory_space<vmem>>, vector<128x128xf32>
    %cst = arith.constant dense<0.000000e+00> : vector<256x128xf32>
    %2 = tpu.matmul %0, %1, %cst {dimension_numbers = #tpu.dot_dimension_numbers<[1], [0], [0], [1], [0, 0, 1, 1], [], []>} : vector<256x128xf32>, vector<128x128xf32>, vector<256x128xf32> -> vector<256x128xf32>
    %3 = arith.truncf %2 : vector<256x128xf32> to vector<256x128xbf16>
    %c0_3 = arith.constant 0 : index
    %c0_4 = arith.constant 0 : index
    %4 = vector.load %arg5[%c0_3, %c0_4] : memref<256x128xbf16, #tpu.memory_space<vmem>>, vector<256x128xbf16>
    tpu.vector_store %arg5[%c0_3, %c0_4], %3 {strides = array<i32>} : memref<256x128xbf16, #tpu.memory_space<vmem>>, vector<256x128xbf16>,
    %c0_5 = arith.constant 0 : index
    %c0_6 = arith.constant 0 : index
    %5 = vector.load %arg3[%c0_5, %c0_6] : memref<128x128xf32, #tpu.memory_space<vmem>>, vector<128x128xf32>
    %cst_7 = arith.constant dense<0.000000e+00> : vector<256x128xf32>
    %6 = tpu.matmul %0, %5, %cst_7 {dimension_numbers = #tpu.dot_dimension_numbers<[1], [0], [0], [1], [0, 0, 1, 1], [], []>} : vector<256x128xf32>, vector<128x128xf32>, vector<256x128xf32> -> vector<256x128xf32>
    %c0_8 = arith.constant 0 : index
    %c0_9 = arith.constant 0 : index
    %7 = vector.load %arg4[%c0_8, %c0_9] : memref<1x128xf32, #tpu.memory_space<vmem>>, vector<1x128xf32>
    %8 = vector.broadcast %7 : vector<1x128xf32> to vector<256x128xf32>
    %9 = arith.addf %6, %8 : vector<256x128xf32>
    %c0_10 = arith.constant 0 : index
    %c0_11 = arith.constant 0 : index
    %10 = vector.load %arg6[%c0_10, %c0_11] : memref<256x128xf32, #tpu.memory_space<vmem>>, vector<256x128xf32>
    tpu.vector_store %arg6[%c0_10, %c0_11], %9 {strides = array<i32>} : memref<256x128xf32, #tpu.memory_space<vmem>>, vector<256x128xf32>,
    return
  }
  func.func @transform_0(%arg0: i32) -> (i32, i32) {
    %c0_i32 = arith.constant 0 : i32
    %c0_i32_0 = arith.constant 0 : i32
    return %arg0, %c0_i32 : i32, i32
  }
  func.func @transform_1(%arg0: i32) -> (i32, i32) {
    %c0_i32 = arith.constant 0 : i32
    %c0_i32_0 = arith.constant 0 : i32
    %c0_i32_1 = arith.constant 0 : i32
    return %c0_i32, %c0_i32_0 : i32, i32
  }
  func.func @transform_2(%arg0: i32) -> (i32, i32) {
    %c0_i32 = arith.constant 0 : i32
    %c0_i32_0 = arith.constant 0 : i32
    %c0_i32_1 = arith.constant 0 : i32
    return %c0_i32, %c0_i32_0 : i32, i32
  }
  func.func @transform_3(%arg0: i32) -> (i32, i32) {
    %c0_i32 = arith.constant 0 : i32
    %c0_i32_0 = arith.constant 0 : i32
    %c0_i32_1 = arith.constant 0 : i32
    return %c0_i32, %c0_i32_0 : i32, i32
  }
  func.func @transform_4(%arg0: i32) -> (i32, i32) {
    %c0_i32 = arith.constant 0 : i32
    %c0_i32_0 = arith.constant 0 : i32
    return %arg0, %c0_i32 : i32, i32
  }
  func.func @transform_5(%arg0: i32) -> (i32, i32) {
    %c0_i32 = arith.constant 0 : i32
    %c0_i32_0 = arith.constant 0 : i32
    return %arg0, %c0_i32 : i32, i32
  }
}

module attributes {stable_mosaic.version = 11 : i64} {
  func.func @kernel(%arg0: i32, %arg1: i32, %arg2: memref<256x256xbf16, #tpu.memory_space<vmem>>, %arg3: memref<256x128xbf16, #tpu.memory_space<vmem>>, %arg4: memref<256x128xf32, #tpu.memory_space<vmem>>, %arg5: memref<256x128xf32, #tpu.memory_space<vmem>>, %arg6: memref<256x128xf32, #tpu.memory_space<vmem>>) attributes {dimension_semantics = [#tpu.dimension_semantics<parallel>, #tpu.dimension_semantics<arbitrary>], iteration_bounds = array<i64: 1, 1>, scalar_prefetch = 0 : i64, scratch_operands = 1 : i64, tpu.core_type = #tpu.core_type<tc>, window_params = [{transform_indices = @transform_0, window_bounds = array<i64: 256, 256>}, {transform_indices = @transform_1, window_bounds = array<i64: 256, 128>}, {transform_indices = @transform_2, window_bounds = array<i64: 256, 128>}, {transform_indices = @transform_3, window_bounds = array<i64: 256, 128>}]} {
    %c0_i32 = arith.constant 0 : i32
    %0 = arith.cmpi eq, %arg1, %c0_i32 : i32
    %1 = arith.extui %0 : i1 to i32
    %c0_i32_0 = arith.constant 0 : i32
    %2 = arith.cmpi ne, %1, %c0_i32_0 : i32
    scf.if %2 {
      %cst_10 = arith.constant 0.000000e+00 : f32
      %12 = vector.broadcast %cst_10 : f32 to vector<256x128xf32>
      %c0_11 = arith.constant 0 : index
      %c0_12 = arith.constant 0 : index
      %13 = vector.load %arg6[%c0_11, %c0_12] : memref<256x128xf32, #tpu.memory_space<vmem>>, vector<256x128xf32>
      tpu.vector_store %arg6[%c0_11, %c0_12], %12 {strides = array<i32>} : memref<256x128xf32, #tpu.memory_space<vmem>>, vector<256x128xf32>,
    } else {
    }
    %c0 = arith.constant 0 : index
    %c0_1 = arith.constant 0 : index
    %3 = vector.load %arg6[%c0, %c0_1] : memref<256x128xf32, #tpu.memory_space<vmem>>, vector<256x128xf32>
    %c0_2 = arith.constant 0 : index
    %c0_3 = arith.constant 0 : index
    %4 = vector.load %arg2[%c0_2, %c0_3] : memref<256x256xbf16, #tpu.memory_space<vmem>>, vector<256x256xbf16>
    %c0_4 = arith.constant 0 : index
    %c0_5 = arith.constant 0 : index
    %5 = vector.load %arg3[%c0_4, %c0_5] : memref<256x128xbf16, #tpu.memory_space<vmem>>, vector<256x128xbf16>
    %cst = arith.constant dense<0.000000e+00> : vector<256x128xf32>
    %6 = tpu.matmul %4, %5, %cst {dimension_numbers = #tpu.dot_dimension_numbers<[1], [0], [0], [1], [0, 0, 1, 1], [], []>} : vector<256x256xbf16>, vector<256x128xbf16>, vector<256x128xf32> -> vector<256x128xf32>
    %7 = arith.addf %3, %6 : vector<256x128xf32>
    %c0_6 = arith.constant 0 : index
    %c0_7 = arith.constant 0 : index
    %8 = vector.load %arg6[%c0_6, %c0_7] : memref<256x128xf32, #tpu.memory_space<vmem>>, vector<256x128xf32>
    tpu.vector_store %arg6[%c0_6, %c0_7], %7 {strides = array<i32>} : memref<256x128xf32, #tpu.memory_space<vmem>>, vector<256x128xf32>,
    %c0_i32_8 = arith.constant 0 : i32
    %9 = arith.cmpi eq, %arg1, %c0_i32_8 : i32
    %10 = arith.extui %9 : i1 to i32
    %c0_i32_9 = arith.constant 0 : i32
    %11 = arith.cmpi ne, %10, %c0_i32_9 : i32
    scf.if %11 {
      %c0_10 = arith.constant 0 : index
      %c0_11 = arith.constant 0 : index
      %12 = vector.load %arg6[%c0_10, %c0_11] : memref<256x128xf32, #tpu.memory_space<vmem>>, vector<256x128xf32>
      %c0_12 = arith.constant 0 : index
      %c0_13 = arith.constant 0 : index
      %13 = vector.load %arg4[%c0_12, %c0_13] : memref<256x128xf32, #tpu.memory_space<vmem>>, vector<256x128xf32>
      %14 = arith.addf %12, %13 : vector<256x128xf32>
      %cst_14 = arith.constant 0.000000e+00 : f32
      %15 = vector.broadcast %cst_14 : f32 to vector<256x128xf32>
      %16 = arith.maximumf %14, %15 : vector<256x128xf32>
      %c0_15 = arith.constant 0 : index
      %c0_16 = arith.constant 0 : index
      %17 = vector.load %arg5[%c0_15, %c0_16] : memref<256x128xf32, #tpu.memory_space<vmem>>, vector<256x128xf32>
      tpu.vector_store %arg5[%c0_15, %c0_16], %16 {strides = array<i32>} : memref<256x128xf32, #tpu.memory_space<vmem>>, vector<256x128xf32>,
    } else {
    }
    return
  }
  func.func @transform_0(%arg0: i32, %arg1: i32) -> (i32, i32) {
    %c0_i32 = arith.constant 0 : i32
    return %arg0, %arg1 : i32, i32
  }
  func.func @transform_1(%arg0: i32, %arg1: i32) -> (i32, i32) {
    %c0_i32 = arith.constant 0 : i32
    %c0_i32_0 = arith.constant 0 : i32
    return %arg1, %c0_i32 : i32, i32
  }
  func.func @transform_2(%arg0: i32, %arg1: i32) -> (i32, i32) {
    %c0_i32 = arith.constant 0 : i32
    %c0_i32_0 = arith.constant 0 : i32
    return %arg0, %c0_i32 : i32, i32
  }
  func.func @transform_3(%arg0: i32, %arg1: i32) -> (i32, i32) {
    %c0_i32 = arith.constant 0 : i32
    %c0_i32_0 = arith.constant 0 : i32
    return %arg0, %c0_i32 : i32, i32
  }
}

module attributes {stable_mosaic.version = 11 : i64} {
  func.func @kernel(%arg0: i32, %arg1: i32, %arg2: memref<256x256xbf16, #tpu.memory_space<vmem>>, %arg3: memref<256x128xbf16, #tpu.memory_space<vmem>>, %arg4: memref<256x128xf32, #tpu.memory_space<vmem>>, %arg5: memref<256x128xf32, #tpu.memory_space<vmem>>, %arg6: memref<256x128xf32, #tpu.memory_space<vmem>>) attributes {dimension_semantics = [#tpu.dimension_semantics<parallel>, #tpu.dimension_semantics<arbitrary>], iteration_bounds = array<i64: 1, 1>, scalar_prefetch = 0 : i64, scratch_operands = 1 : i64, tpu.core_type = #tpu.core_type<tc>, window_params = [{transform_indices = @transform_0, window_bounds = array<i64: 256, 256>}, {transform_indices = @transform_1, window_bounds = array<i64: 256, 128>}, {transform_indices = @transform_2, window_bounds = array<i64: 256, 128>}, {transform_indices = @transform_3, window_bounds = array<i64: 256, 128>}]} {
    %c0_i32 = arith.constant 0 : i32
    %0 = arith.cmpi eq, %arg1, %c0_i32 : i32
    %1 = arith.extui %0 : i1 to i32
    %c0_i32_0 = arith.constant 0 : i32
    %2 = arith.cmpi ne, %1, %c0_i32_0 : i32
    scf.if %2 {
      %cst_10 = arith.constant 0.000000e+00 : f32
      %12 = vector.broadcast %cst_10 : f32 to vector<256x128xf32>
      %c0_11 = arith.constant 0 : index
      %c0_12 = arith.constant 0 : index
      %13 = vector.load %arg6[%c0_11, %c0_12] : memref<256x128xf32, #tpu.memory_space<vmem>>, vector<256x128xf32>
      tpu.vector_store %arg6[%c0_11, %c0_12], %12 {strides = array<i32>} : memref<256x128xf32, #tpu.memory_space<vmem>>, vector<256x128xf32>,
    } else {
    }
    %c0 = arith.constant 0 : index
    %c0_1 = arith.constant 0 : index
    %3 = vector.load %arg6[%c0, %c0_1] : memref<256x128xf32, #tpu.memory_space<vmem>>, vector<256x128xf32>
    %c0_2 = arith.constant 0 : index
    %c0_3 = arith.constant 0 : index
    %4 = vector.load %arg2[%c0_2, %c0_3] : memref<256x256xbf16, #tpu.memory_space<vmem>>, vector<256x256xbf16>
    %c0_4 = arith.constant 0 : index
    %c0_5 = arith.constant 0 : index
    %5 = vector.load %arg3[%c0_4, %c0_5] : memref<256x128xbf16, #tpu.memory_space<vmem>>, vector<256x128xbf16>
    %cst = arith.constant dense<0.000000e+00> : vector<256x128xf32>
    %6 = tpu.matmul %4, %5, %cst {dimension_numbers = #tpu.dot_dimension_numbers<[1], [0], [0], [1], [0, 0, 1, 1], [], []>} : vector<256x256xbf16>, vector<256x128xbf16>, vector<256x128xf32> -> vector<256x128xf32>
    %7 = arith.addf %3, %6 : vector<256x128xf32>
    %c0_6 = arith.constant 0 : index
    %c0_7 = arith.constant 0 : index
    %8 = vector.load %arg6[%c0_6, %c0_7] : memref<256x128xf32, #tpu.memory_space<vmem>>, vector<256x128xf32>
    tpu.vector_store %arg6[%c0_6, %c0_7], %7 {strides = array<i32>} : memref<256x128xf32, #tpu.memory_space<vmem>>, vector<256x128xf32>,
    %c0_i32_8 = arith.constant 0 : i32
    %9 = arith.cmpi eq, %arg1, %c0_i32_8 : i32
    %10 = arith.extui %9 : i1 to i32
    %c0_i32_9 = arith.constant 0 : i32
    %11 = arith.cmpi ne, %10, %c0_i32_9 : i32
    scf.if %11 {
      %c0_10 = arith.constant 0 : index
      %c0_11 = arith.constant 0 : index
      %12 = vector.load %arg6[%c0_10, %c0_11] : memref<256x128xf32, #tpu.memory_space<vmem>>, vector<256x128xf32>
      %c0_12 = arith.constant 0 : index
      %c0_13 = arith.constant 0 : index
      %13 = vector.load %arg4[%c0_12, %c0_13] : memref<256x128xf32, #tpu.memory_space<vmem>>, vector<256x128xf32>
      %14 = arith.addf %12, %13 : vector<256x128xf32>
      %15 = tpu.iota {dimensions = array<i32: 1>} : vector<256x128xi32>
      %c8_i32 = arith.constant 8 : i32
      %16 = vector.broadcast %c8_i32 : i32 to vector<256x128xi32>
      %17 = arith.cmpi slt, %15, %16 : vector<256x128xi32>
      %cst_14 = arith.constant 0xFF800000 : f32
      %18 = vector.broadcast %cst_14 : f32 to vector<256x128xf32>
      %19 = arith.select %17, %14, %18 : vector<256x128xi1>, vector<256x128xf32>
      %cst_15 = arith.constant dense<0xFF800000> : vector<256xf32>
      %20 = vector.multi_reduction <maximumf>, %19, %cst_15 [1] : vector<256x128xf32> to vector<256xf32>
      %21 = vector.shape_cast %20 : vector<256xf32> to vector<256x1xf32>
      %22 = vector.broadcast %21 : vector<256x1xf32> to vector<256x128xf32>
      %23 = arith.subf %19, %22 : vector<256x128xf32>
      %24 = math.exp %23 : vector<256x128xf32>
      %cst_16 = arith.constant dense<0.000000e+00> : vector<256xf32>
      %25 = vector.multi_reduction <add>, %24, %cst_16 [1] : vector<256x128xf32> to vector<256xf32>
      %26 = vector.shape_cast %25 : vector<256xf32> to vector<256x1xf32>
      %27 = math.log %26 : vector<256x1xf32>
      %28 = vector.broadcast %27 : vector<256x1xf32> to vector<256x128xf32>
      %29 = arith.subf %23, %28 : vector<256x128xf32>
      %c0_17 = arith.constant 0 : index
      %c0_18 = arith.constant 0 : index
      %30 = vector.load %arg5[%c0_17, %c0_18] : memref<256x128xf32, #tpu.memory_space<vmem>>, vector<256x128xf32>
      tpu.vector_store %arg5[%c0_17, %c0_18], %29 {strides = array<i32>} : memref<256x128xf32, #tpu.memory_space<vmem>>, vector<256x128xf32>,
    } else {
    }
    return
  }
  func.func @transform_0(%arg0: i32, %arg1: i32) -> (i32, i32) {
    %c0_i32 = arith.constant 0 : i32
    return %arg0, %arg1 : i32, i32
  }
  func.func @transform_1(%arg0: i32, %arg1: i32) -> (i32, i32) {
    %c0_i32 = arith.constant 0 : i32
    %c0_i32_0 = arith.constant 0 : i32
    return %arg1, %c0_i32 : i32, i32
  }
  func.func @transform_2(%arg0: i32, %arg1: i32) -> (i32, i32) {
    %c0_i32 = arith.constant 0 : i32
    %c0_i32_0 = arith.constant 0 : i32
    return %arg0, %c0_i32 : i32, i32
  }
  func.func @transform_3(%arg0: i32, %arg1: i32) -> (i32, i32) {
    %c0_i32 = arith.constant 0 : i32
    %c0_i32_0 = arith.constant 0 : i32
    return %arg0, %c0_i32 : i32, i32
  }
}

</mosaic_0001>

<llo_original>
// kernel: net_forward.4
$region0: #{net_forward.4}
  #allocation0 [shape = 'u32[]', space=smem, size = 0x4, offset = 0x4, fixed_abs, tag = 'smem constant byte address 0x4 - core index']
  #allocation1 [shape = 'u32[72,128]{1,0:T(1,128)}', space=vmem, size = 0x9000, scoped, tag = 'internal scratch']
  %s0 = inlined_call_operand.vmem [shape: f32[256,128], index: 0, kind: input, shape index: {}]
  %s1 = inlined_call_operand.vmem [shape: f32[128,128], index: 1, kind: input, shape index: {}]
  %s2 = inlined_call_operand.vmem [shape: f32[128,128], index: 2, kind: input, shape index: {}]
  %s3 = inlined_call_operand.vmem [shape: f32[1,128], index: 3, kind: input, shape index: {}]
  %s4 = inlined_call_operand.vmem [shape: bf16[256,128], index: 4, kind: output, shape index: {0}]
  %s5 = inlined_call_operand.vmem [shape: f32[256,128], index: 5, kind: output, shape index: {1}]
  %6 = xla_tuple %s4, %s5
  %s7 = sld [smem:[#allocation0]]
  $region34: #{net_forward.4} parent=0
    _
  %s9 = ssub.s32 1, %s7
  %s10 = scalar_select 0, %s9, %s7
  // Predicated region
  $region2: #{net_forward.4} parent=0 // pred_check
    _
  $region3: #{net_forward.4} parent=0 // pred_check_branch
    %12 = sbr.rel (0) target = $region5
  $region4: #{net_forward.4} parent=0 // pred_region
    _
  $region5: #{net_forward.4} parent=0 // pred_fallthru
    _
  // Predicated region
  $region6: #{net_forward.4} parent=0 // pred_check
    _
  $region7: #{net_forward.4} parent=0 // pred_check_branch
    %14 = sbr.rel (0) target = $region9
  $region8: #{net_forward.4} parent=0 // pred_region
    _
  $region9: #{net_forward.4} parent=0 // pred_fallthru
    _
  // Predicated region
  $region10: #{net_forward.4} parent=0 // pred_check
    _
  $region11: #{net_forward.4} parent=0 // pred_check_branch
    %16 = sbr.rel (0) target = $region13
  $region12: #{net_forward.4} parent=0 // pred_region
    _
  $region13: #{net_forward.4} parent=0 // pred_fallthru
    _
  // Predicated region
  $region14: #{net_forward.4} parent=0 // pred_check
    _
  $region15: #{net_forward.4} parent=0 // pred_check_branch
    %18 = sbr.rel (0) target = $region17
  $region16: #{net_forward.4} parent=0 // pred_region
    _
  $region17: #{net_forward.4} parent=0 // pred_fallthru
    _
  %v19 = vld [vmem:[%s0] sm:$0xff]
  %v20 = vld [vmem:[%s0 + $0x8] sm:$0xff]
  %v21 = vld [vmem:[%s0 + $0x10] sm:$0xff]
  %v22 = vld [vmem:[%s0 + $0x18] sm:$0xff]
  %v23 = vld [vmem:[%s0 + $0x20] sm:$0xff]
  %v24 = vld [vmem:[%s0 + $0x28] sm:$0xff]
  %v25 = vld [vmem:[%s0 + $0x30] sm:$0xff]
  %v26 = vld [vmem:[%s0 + $0x38] sm:$0xff]
  %v27 = vld [vmem:[%s0 + $0x40] sm:$0xff]
  %v28 = vld [vmem:[%s0 + $0x48] sm:$0xff]
  %v29 = vld [vmem:[%s0 + $0x50] sm:$0xff]
  %v30 = vld [vmem:[%s0 + $0x58] sm:$0xff]
  %v31 = vld [vmem:[%s0 + $0x60] sm:$0xff]
  %v32 = vld [vmem:[%s0 + $0x68] sm:$0xff]
  %v33 = vld [vmem:[%s0 + $0x70] sm:$0xff]
  %v34 = vld [vmem:[%s0 + $0x78] sm:$0xff]
  %v35 = vld [vmem:[%s0 + $0x80] sm:$0xff]
  %v36 = vld [vmem:[%s0 + $0x88] sm:$0xff]
  %v37 = vld [vmem:[%s0 + $0x90] sm:$0xff]
  %v38 = vld [vmem:[%s0 + $0x98] sm:$0xff]
  %v39 = vld [vmem:[%s0 + $0xa0] sm:$0xff]
  %v40 = vld [vmem:[%s0 + $0xa8] sm:$0xff]
  %v41 = vld [vmem:[%s0 + $0xb0] sm:$0xff]
  %v42 = vld [vmem:[%s0 + $0xb8] sm:$0xff]
  %v43 = vld [vmem:[%s0 + $0xc0] sm:$0xff]
  %v44 = vld [vmem:[%s0 + $0xc8] sm:$0xff]
  %v45 = vld [vmem:[%s0 + $0xd0] sm:$0xff]
  %v46 = vld [vmem:[%s0 + $0xd8] sm:$0xff]
  %v47 = vld [vmem:[%s0 + $0xe0] sm:$0xff]
  %v48 = vld [vmem:[%s0 + $0xe8] sm:$0xff]
  %v49 = vld [vmem:[%s0 + $0xf0] sm:$0xff]
  %v50 = vld [vmem:[%s0 + $0xf8] sm:$0xff]
  %v51 = vld [vmem:[%s1] sm:$0xff]
  %v52 = vld [vmem:[%s1 + $0x8] sm:$0xff]
  %v53 = vld [vmem:[%s1 + $0x10] sm:$0xff]
  %v54 = vld [vmem:[%s1 + $0x18] sm:$0xff]
  %v55 = vld [vmem:[%s1 + $0x20] sm:$0xff]
  %v56 = vld [vmem:[%s1 + $0x28] sm:$0xff]
  %v57 = vld [vmem:[%s1 + $0x30] sm:$0xff]
  %v58 = vld [vmem:[%s1 + $0x38] sm:$0xff]
  %v59 = vld [vmem:[%s1 + $0x40] sm:$0xff]
  %v60 = vld [vmem:[%s1 + $0x48] sm:$0xff]
  %v61 = vld [vmem:[%s1 + $0x50] sm:$0xff]
  %v62 = vld [vmem:[%s1 + $0x58] sm:$0xff]
  %v63 = vld [vmem:[%s1 + $0x60] sm:$0xff]
  %v64 = vld [vmem:[%s1 + $0x68] sm:$0xff]
  %v65 = vld [vmem:[%s1 + $0x70] sm:$0xff]
  %v66 = vld [vmem:[%s1 + $0x78] sm:$0xff]
  %67 = vmatpush.msra.mxu0 %v66
  %68 = vmatpush.msra.mxu0 %v65
  %69 = vmatpush.msra.mxu0 %v64
  %70 = vmatpush.msra.mxu0 %v63
  %71 = vmatpush.msra.mxu0 %v62
  %72 = vmatpush.msra.mxu0 %v61
  %73 = vmatpush.msra.mxu0 %v60
  %74 = vmatpush.msra.mxu0 %v59
  %75 = vmatpush.msra.mxu0 %v58
  %76 = vmatpush.msra.mxu0 %v57
  %77 = vmatpush.msra.mxu0 %v56
  %78 = vmatpush.msra.mxu0 %v55
  %79 = vmatpush.msra.mxu0 %v54
  %80 = vmatpush.msra.mxu0 %v53
  %81 = vmatpush.msra.mxu0 %v52
  %82 = vmatpush.msra.mxu0 %v51
  %83 = vmatmul.f32.gmra.mxu0 %v19
  %v84 = vpop.f32.mrf.mxu0
  %v85 = vadd.f32 0.0, %v84
  %86 = vmatmul.f32.gmra.mxu0 %v20
  %v87 = vpop.f32.mrf.mxu0
  %v88 = vadd.f32 0.0, %v87
  %89 = vmatmul.f32.gmra.mxu0 %v21
  %v90 = vpop.f32.mrf.mxu0
  %v91 = vadd.f32 0.0, %v90
  %92 = vmatmul.f32.gmra.mxu0 %v22
  %v93 = vpop.f32.mrf.mxu0
  %v94 = vadd.f32 0.0, %v93
  %95 = vmatmul.f32.gmra.mxu0 %v23
  %v96 = vpop.f32.mrf.mxu0
  %v97 = vadd.f32 0.0, %v96
  %98 = vmatmul.f32.gmra.mxu0 %v24
  %v99 = vpop.f32.mrf.mxu0
  %v100 = vadd.f32 0.0, %v99
  %101 = vmatmul.f32.gmra.mxu0 %v25
  %v102 = vpop.f32.mrf.mxu0
  %v103 = vadd.f32 0.0, %v102
  %104 = vmatmul.f32.gmra.mxu0 %v26
  %v105 = vpop.f32.mrf.mxu0
  %v106 = vadd.f32 0.0, %v105
  %107 = vmatmul.f32.gmra.mxu0 %v27
  %v108 = vpop.f32.mrf.mxu0
  %v109 = vadd.f32 0.0, %v108
  %110 = vmatmul.f32.gmra.mxu0 %v28
  %v111 = vpop.f32.mrf.mxu0
  %v112 = vadd.f32 0.0, %v111
  %113 = vmatmul.f32.gmra.mxu0 %v29
  %v114 = vpop.f32.mrf.mxu0
  %v115 = vadd.f32 0.0, %v114
  %116 = vmatmul.f32.gmra.mxu0 %v30
  %v117 = vpop.f32.mrf.mxu0
  %v118 = vadd.f32 0.0, %v117
  %119 = vmatmul.f32.gmra.mxu0 %v31
  %v120 = vpop.f32.mrf.mxu0
  %v121 = vadd.f32 0.0, %v120
  %122 = vmatmul.f32.gmra.mxu0 %v32
  %v123 = vpop.f32.mrf.mxu0
  %v124 = vadd.f32 0.0, %v123
  %125 = vmatmul.f32.gmra.mxu0 %v33
  %v126 = vpop.f32.mrf.mxu0
  %v127 = vadd.f32 0.0, %v126
  %128 = vmatmul.f32.gmra.mxu0 %v34
  %v129 = vpop.f32.mrf.mxu0
  %v130 = vadd.f32 0.0, %v129
  %131 = vmatmul.f32.gmra.mxu0 %v35
  %v132 = vpop.f32.mrf.mxu0
  %v133 = vadd.f32 0.0, %v132
  %134 = vmatmul.f32.gmra.mxu0 %v36
  %v135 = vpop.f32.mrf.mxu0
  %v136 = vadd.f32 0.0, %v135
  %137 = vmatmul.f32.gmra.mxu0 %v37
  %v138 = vpop.f32.mrf.mxu0
  %v139 = vadd.f32 0.0, %v138
  %140 = vmatmul.f32.gmra.mxu0 %v38
  %v141 = vpop.f32.mrf.mxu0
  %v142 = vadd.f32 0.0, %v141
  %143 = vmatmul.f32.gmra.mxu0 %v39
  %v144 = vpop.f32.mrf.mxu0
  %v145 = vadd.f32 0.0, %v144
  %146 = vmatmul.f32.gmra.mxu0 %v40
  %v147 = vpop.f32.mrf.mxu0
  %v148 = vadd.f32 0.0, %v147
  %149 = vmatmul.f32.gmra.mxu0 %v41
  %v150 = vpop.f32.mrf.mxu0
  %v151 = vadd.f32 0.0, %v150
  %152 = vmatmul.f32.gmra.mxu0 %v42
  %v153 = vpop.f32.mrf.mxu0
  %v154 = vadd.f32 0.0, %v153
  %155 = vmatmul.f32.gmra.mxu0 %v43
  %v156 = vpop.f32.mrf.mxu0
  %v157 = vadd.f32 0.0, %v156
  %158 = vmatmul.f32.gmra.mxu0 %v44
  %v159 = vpop.f32.mrf.mxu0
  %v160 = vadd.f32 0.0, %v159
  %161 = vmatmul.f32.gmra.mxu0 %v45
  %v162 = vpop.f32.mrf.mxu0
  %v163 = vadd.f32 0.0, %v162
  %164 = vmatmul.f32.gmra.mxu0 %v46
  %v165 = vpop.f32.mrf.mxu0
  %v166 = vadd.f32 0.0, %v165
  %167 = vmatmul.f32.gmra.mxu0 %v47
  %v168 = vpop.f32.mrf.mxu0
  %v169 = vadd.f32 0.0, %v168
  %170 = vmatmul.f32.gmra.mxu0 %v48
  %v171 = vpop.f32.mrf.mxu0
  %v172 = vadd.f32 0.0, %v171
  %173 = vmatmul.f32.gmra.mxu0 %v49
  %v174 = vpop.f32.mrf.mxu0
  %v175 = vadd.f32 0.0, %v174
  %176 = vmatmul.f32.gmra.mxu0 %v50
  %v177 = vpop.f32.mrf.mxu0
  %v178 = vadd.f32 0.0, %v177
  %179 = vdwg.mxu0
  %v180 = vpack.c.bf16 %v85, %v85
  %v181 = vpack.c.bf16 %v88, %v88
  %v182 = vpack.c.bf16 %v91, %v91
  %v183 = vpack.c.bf16 %v94, %v94
  %v184 = vpack.c.bf16 %v97, %v97
  %v185 = vpack.c.bf16 %v100, %v100
  %v186 = vpack.c.bf16 %v103, %v103
  %v187 = vpack.c.bf16 %v106, %v106
  %v188 = vpack.c.bf16 %v109, %v109
  %v189 = vpack.c.bf16 %v112, %v112
  %v190 = vpack.c.bf16 %v115, %v115
  %v191 = vpack.c.bf16 %v118, %v118
  %v192 = vpack.c.bf16 %v121, %v121
  %v193 = vpack.c.bf16 %v124, %v124
  %v194 = vpack.c.bf16 %v127, %v127
  %v195 = vpack.c.bf16 %v130, %v130
  %v196 = vpack.c.bf16 %v133, %v133
  %v197 = vpack.c.bf16 %v136, %v136
  %v198 = vpack.c.bf16 %v139, %v139
  %v199 = vpack.c.bf16 %v142, %v142
  %v200 = vpack.c.bf16 %v145, %v145
  %v201 = vpack.c.bf16 %v148, %v148
  %v202 = vpack.c.bf16 %v151, %v151
  %v203 = vpack.c.bf16 %v154, %v154
  %v204 = vpack.c.bf16 %v157, %v157
  %v205 = vpack.c.bf16 %v160, %v160
  %v206 = vpack.c.bf16 %v163, %v163
  %v207 = vpack.c.bf16 %v166, %v166
  %v208 = vpack.c.bf16 %v169, %v169
  %v209 = vpack.c.bf16 %v172, %v172
  %v210 = vpack.c.bf16 %v175, %v175
  %v211 = vpack.c.bf16 %v178, %v178
  %212 = vst [vmem:[%s4] sm:$0xf] %v180
  %213 = vst [vmem:[%s4 + $0x4] sm:$0xf] %v181
  %214 = vst [vmem:[%s4 + $0x8] sm:$0xf] %v182
  %215 = vst [vmem:[%s4 + $0xc] sm:$0xf] %v183
  %216 = vst [vmem:[%s4 + $0x10] sm:$0xf] %v184
  %217 = vst [vmem:[%s4 + $0x14] sm:$0xf] %v185
  %218 = vst [vmem:[%s4 + $0x18] sm:$0xf] %v186
  %219 = vst [vmem:[%s4 + $0x1c] sm:$0xf] %v187
  %220 = vst [vmem:[%s4 + $0x20] sm:$0xf] %v188
  %221 = vst [vmem:[%s4 + $0x24] sm:$0xf] %v189
  %222 = vst [vmem:[%s4 + $0x28] sm:$0xf] %v190
  %223 = vst [vmem:[%s4 + $0x2c] sm:$0xf] %v191
  %224 = vst [vmem:[%s4 + $0x30] sm:$0xf] %v192
  %225 = vst [vmem:[%s4 + $0x34] sm:$0xf] %v193
  %226 = vst [vmem:[%s4 + $0x38] sm:$0xf] %v194
  %227 = vst [vmem:[%s4 + $0x3c] sm:$0xf] %v195
  %228 = vst [vmem:[%s4 + $0x40] sm:$0xf] %v196
  %229 = vst [vmem:[%s4 + $0x44] sm:$0xf] %v197
  %230 = vst [vmem:[%s4 + $0x48] sm:$0xf] %v198
  %231 = vst [vmem:[%s4 + $0x4c] sm:$0xf] %v199
  %232 = vst [vmem:[%s4 + $0x50] sm:$0xf] %v200
  %233 = vst [vmem:[%s4 + $0x54] sm:$0xf] %v201
  %234 = vst [vmem:[%s4 + $0x58] sm:$0xf] %v202
  %235 = vst [vmem:[%s4 + $0x5c] sm:$0xf] %v203
  %236 = vst [vmem:[%s4 + $0x60] sm:$0xf] %v204
  %237 = vst [vmem:[%s4 + $0x64] sm:$0xf] %v205
  %238 = vst [vmem:[%s4 + $0x68] sm:$0xf] %v206
  %239 = vst [vmem:[%s4 + $0x6c] sm:$0xf] %v207
  %240 = vst [vmem:[%s4 + $0x70] sm:$0xf] %v208
  %241 = vst [vmem:[%s4 + $0x74] sm:$0xf] %v209
  %242 = vst [vmem:[%s4 + $0x78] sm:$0xf] %v210
  %243 = vst [vmem:[%s4 + $0x7c] sm:$0xf] %v211
  %v244 = vld [vmem:[%s2] sm:$0xff]
  %v245 = vld [vmem:[%s2 + $0x8] sm:$0xff]
  %v246 = vld [vmem:[%s2 + $0x10] sm:$0xff]
  %v247 = vld [vmem:[%s2 + $0x18] sm:$0xff]
  %v248 = vld [vmem:[%s2 + $0x20] sm:$0xff]
  %v249 = vld [vmem:[%s2 + $0x28] sm:$0xff]
  %v250 = vld [vmem:[%s2 + $0x30] sm:$0xff]
  %v251 = vld [vmem:[%s2 + $0x38] sm:$0xff]
  %v252 = vld [vmem:[%s2 + $0x40] sm:$0xff]
  %v253 = vld [vmem:[%s2 + $0x48] sm:$0xff]
  %v254 = vld [vmem:[%s2 + $0x50] sm:$0xff]
  %v255 = vld [vmem:[%s2 + $0x58] sm:$0xff]
  %v256 = vld [vmem:[%s2 + $0x60] sm:$0xff]
  %v257 = vld [vmem:[%s2 + $0x68] sm:$0xff]
  %v258 = vld [vmem:[%s2 + $0x70] sm:$0xff]
  %v259 = vld [vmem:[%s2 + $0x78] sm:$0xff]
  %v260 = vld [vmem:[%s3] sm:$0x1]
  %v262 = vperm.slane %v260, 0
  %264 = vmatpush.msra.mxu0 %v259
  %265 = vmatpush.msra.mxu0 %v258
  %266 = vmatpush.msra.mxu0 %v257
  %267 = vmatpush.msra.mxu0 %v256
  %268 = vmatpush.msra.mxu0 %v255
  %269 = vmatpush.msra.mxu0 %v254
  %270 = vmatpush.msra.mxu0 %v253
  %271 = vmatpush.msra.mxu0 %v252
  %272 = vmatpush.msra.mxu0 %v251
  %273 = vmatpush.msra.mxu0 %v250
  %274 = vmatpush.msra.mxu0 %v249
  %275 = vmatpush.msra.mxu0 %v248
  %276 = vmatpush.msra.mxu0 %v247
  %277 = vmatpush.msra.mxu0 %v246
  %278 = vmatpush.msra.mxu0 %v245
  %279 = vmatpush.msra.mxu0 %v244
  %280 = vmatmul.f32.gmra.mxu0 %v19
  %v281 = vpop.f32.mrf.mxu0
  %v282 = vadd.f32 %v262, %v281
  %283 = vmatmul.f32.gmra.mxu0 %v20
  %v284 = vpop.f32.mrf.mxu0
  %v285 = vadd.f32 %v262, %v284
  %286 = vmatmul.f32.gmra.mxu0 %v21
  %v287 = vpop.f32.mrf.mxu0
  %v288 = vadd.f32 %v262, %v287
  %289 = vmatmul.f32.gmra.mxu0 %v22
  %v290 = vpop.f32.mrf.mxu0
  %v291 = vadd.f32 %v262, %v290
  %292 = vmatmul.f32.gmra.mxu0 %v23
  %v293 = vpop.f32.mrf.mxu0
  %v294 = vadd.f32 %v262, %v293
  %295 = vmatmul.f32.gmra.mxu0 %v24
  %v296 = vpop.f32.mrf.mxu0
  %v297 = vadd.f32 %v262, %v296
  %298 = vmatmul.f32.gmra.mxu0 %v25
  %v299 = vpop.f32.mrf.mxu0
  %v300 = vadd.f32 %v262, %v299
  %301 = vmatmul.f32.gmra.mxu0 %v26
  %v302 = vpop.f32.mrf.mxu0
  %v303 = vadd.f32 %v262, %v302
  %304 = vmatmul.f32.gmra.mxu0 %v27
  %v305 = vpop.f32.mrf.mxu0
  %v306 = vadd.f32 %v262, %v305
  %307 = vmatmul.f32.gmra.mxu0 %v28
  %v308 = vpop.f32.mrf.mxu0
  %v309 = vadd.f32 %v262, %v308
  %310 = vmatmul.f32.gmra.mxu0 %v29
  %v311 = vpop.f32.mrf.mxu0
  %v312 = vadd.f32 %v262, %v311
  %313 = vmatmul.f32.gmra.mxu0 %v30
  %v314 = vpop.f32.mrf.mxu0
  %v315 = vadd.f32 %v262, %v314
  %316 = vmatmul.f32.gmra.mxu0 %v31
  %v317 = vpop.f32.mrf.mxu0
  %v318 = vadd.f32 %v262, %v317
  %319 = vmatmul.f32.gmra.mxu0 %v32
  %v320 = vpop.f32.mrf.mxu0
  %v321 = vadd.f32 %v262, %v320
  %322 = vmatmul.f32.gmra.mxu0 %v33
  %v323 = vpop.f32.mrf.mxu0
  %v324 = vadd.f32 %v262, %v323
  %325 = vmatmul.f32.gmra.mxu0 %v34
  %v326 = vpop.f32.mrf.mxu0
  %v327 = vadd.f32 %v262, %v326
  %328 = vmatmul.f32.gmra.mxu0 %v35
  %v329 = vpop.f32.mrf.mxu0
  %v330 = vadd.f32 %v262, %v329
  %331 = vmatmul.f32.gmra.mxu0 %v36
  %v332 = vpop.f32.mrf.mxu0
  %v333 = vadd.f32 %v262, %v332
  %334 = vmatmul.f32.gmra.mxu0 %v37
  %v335 = vpop.f32.mrf.mxu0
  %v336 = vadd.f32 %v262, %v335
  %337 = vmatmul.f32.gmra.mxu0 %v38
  %v338 = vpop.f32.mrf.mxu0
  %v339 = vadd.f32 %v262, %v338
  %340 = vmatmul.f32.gmra.mxu0 %v39
  %v341 = vpop.f32.mrf.mxu0
  %v342 = vadd.f32 %v262, %v341
  %343 = vmatmul.f32.gmra.mxu0 %v40
  %v344 = vpop.f32.mrf.mxu0
  %v345 = vadd.f32 %v262, %v344
  %346 = vmatmul.f32.gmra.mxu0 %v41
  %v347 = vpop.f32.mrf.mxu0
  %v348 = vadd.f32 %v262, %v347
  %349 = vmatmul.f32.gmra.mxu0 %v42
  %v350 = vpop.f32.mrf.mxu0
  %v351 = vadd.f32 %v262, %v350
  %352 = vmatmul.f32.gmra.mxu0 %v43
  %v353 = vpop.f32.mrf.mxu0
  %v354 = vadd.f32 %v262, %v353
  %355 = vmatmul.f32.gmra.mxu0 %v44
  %v356 = vpop.f32.mrf.mxu0
  %v357 = vadd.f32 %v262, %v356
  %358 = vmatmul.f32.gmra.mxu0 %v45
  %v359 = vpop.f32.mrf.mxu0
  %v360 = vadd.f32 %v262, %v359
  %361 = vmatmul.f32.gmra.mxu0 %v46
  %v362 = vpop.f32.mrf.mxu0
  %v363 = vadd.f32 %v262, %v362
  %364 = vmatmul.f32.gmra.mxu0 %v47
  %v365 = vpop.f32.mrf.mxu0
  %v366 = vadd.f32 %v262, %v365
  %367 = vmatmul.f32.gmra.mxu0 %v48
  %v368 = vpop.f32.mrf.mxu0
  %v369 = vadd.f32 %v262, %v368
  %370 = vmatmul.f32.gmra.mxu0 %v49
  %v371 = vpop.f32.mrf.mxu0
  %v372 = vadd.f32 %v262, %v371
  %373 = vmatmul.f32.gmra.mxu0 %v50
  %v374 = vpop.f32.mrf.mxu0
  %v375 = vadd.f32 %v262, %v374
  %376 = vdwg.mxu0
  %377 = vst [vmem:[%s5] sm:$0xff] %v282
  %378 = vst [vmem:[%s5 + $0x8] sm:$0xff] %v285
  %379 = vst [vmem:[%s5 + $0x10] sm:$0xff] %v288
  %380 = vst [vmem:[%s5 + $0x18] sm:$0xff] %v291
  %381 = vst [vmem:[%s5 + $0x20] sm:$0xff] %v294
  %382 = vst [vmem:[%s5 + $0x28] sm:$0xff] %v297
  %383 = vst [vmem:[%s5 + $0x30] sm:$0xff] %v300
  %384 = vst [vmem:[%s5 + $0x38] sm:$0xff] %v303
  %385 = vst [vmem:[%s5 + $0x40] sm:$0xff] %v306
  %386 = vst [vmem:[%s5 + $0x48] sm:$0xff] %v309
  %387 = vst [vmem:[%s5 + $0x50] sm:$0xff] %v312
  %388 = vst [vmem:[%s5 + $0x58] sm:$0xff] %v315
  %389 = vst [vmem:[%s5 + $0x60] sm:$0xff] %v318
  %390 = vst [vmem:[%s5 + $0x68] sm:$0xff] %v321
  %391 = vst [vmem:[%s5 + $0x70] sm:$0xff] %v324
  %392 = vst [vmem:[%s5 + $0x78] sm:$0xff] %v327
  %393 = vst [vmem:[%s5 + $0x80] sm:$0xff] %v330
  %394 = vst [vmem:[%s5 + $0x88] sm:$0xff] %v333
  %395 = vst [vmem:[%s5 + $0x90] sm:$0xff] %v336
  %396 = vst [vmem:[%s5 + $0x98] sm:$0xff] %v339
  %397 = vst [vmem:[%s5 + $0xa0] sm:$0xff] %v342
  %398 = vst [vmem:[%s5 + $0xa8] sm:$0xff] %v345
  %399 = vst [vmem:[%s5 + $0xb0] sm:$0xff] %v348
  %400 = vst [vmem:[%s5 + $0xb8] sm:$0xff] %v351
  %401 = vst [vmem:[%s5 + $0xc0] sm:$0xff] %v354
  %402 = vst [vmem:[%s5 + $0xc8] sm:$0xff] %v357
  %403 = vst [vmem:[%s5 + $0xd0] sm:$0xff] %v360
  %404 = vst [vmem:[%s5 + $0xd8] sm:$0xff] %v363
  %405 = vst [vmem:[%s5 + $0xe0] sm:$0xff] %v366
  %406 = vst [vmem:[%s5 + $0xe8] sm:$0xff] %v369
  %407 = vst [vmem:[%s5 + $0xf0] sm:$0xff] %v372
  %408 = vst [vmem:[%s5 + $0xf8] sm:$0xff] %v375
  // Predicated region
  $region18: #{net_forward.4} parent=0 // pred_check
    _
  $region19: #{net_forward.4} parent=0 // pred_check_branch
    %410 = sbr.rel (0) target = $region21
  $region20: #{net_forward.4} parent=0 // pred_region
    _
  $region21: #{net_forward.4} parent=0 // pred_fallthru
    _
  // Predicated region
  $region22: #{net_forward.4} parent=0 // pred_check
    _
  $region23: #{net_forward.4} parent=0 // pred_check_branch
    %412 = sbr.rel (0) target = $region25
  $region24: #{net_forward.4} parent=0 // pred_region
    _
  $region25: #{net_forward.4} parent=0 // pred_fallthru
    _
  // Predicated region
  $region26: #{net_forward.4} parent=0 // pred_check
    _
  $region27: #{net_forward.4} parent=0 // pred_check_branch
    %414 = sbr.rel (0) target = $region29
  $region28: #{net_forward.4} parent=0 // pred_region
    _
  $region29: #{net_forward.4} parent=0 // pred_fallthru
    _
  // Predicated region
  $region30: #{net_forward.4} parent=0 // pred_check
    _
  $region31: #{net_forward.4} parent=0 // pred_check_branch
    %416 = sbr.rel (0) target = $region33
  $region32: #{net_forward.4} parent=0 // pred_region
    _
  $region33: #{net_forward.4} parent=0 // pred_fallthru
    _

// kernel: net_forward.5
$region0: #{net_forward.5}
  #allocation0 [shape = 'u32[]', space=smem, size = 0x4, offset = 0x4, fixed_abs, tag = 'smem constant byte address 0x4 - core index']
  #allocation1 [shape = 'u32[72,128]{1,0:T(1,128)}', space=vmem, size = 0x9000, scoped, tag = 'internal scratch']
  #allocation2 [shape = 'f32[256,128]{1,0:T(8,128)}', space=vmem, size = 0x20000, scoped, tag = 'scratch operand']
  %s0 = inlined_call_operand.vmem [shape: bf16[256,256], index: 0, kind: input, shape index: {}]
  %s1 = inlined_call_operand.vmem [shape: bf16[256,128], index: 1, kind: input, shape index: {}]
  %s2 = inlined_call_operand.vmem [shape: f32[256,128], index: 2, kind: input, shape index: {}]
  %s3 = inlined_call_operand.vmem [shape: f32[256,128], index: 3, kind: output, shape index: {}]
  %s4 = sld [smem:[#allocation0]]
  $region30: #{net_forward.5} parent=0
    _
  %s6 = ssub.s32 1, %s4
  %s7 = scalar_select 0, %s6, %s4
  // Predicated region
  $region2: #{net_forward.5} parent=0 // pred_check
    _
  $region3: #{net_forward.5} parent=0 // pred_check_branch
    %9 = sbr.rel (0) target = $region5
  $region4: #{net_forward.5} parent=0 // pred_region
    _
  $region5: #{net_forward.5} parent=0 // pred_fallthru
    _
  // Predicated region
  $region6: #{net_forward.5} parent=0 // pred_check
    _
  $region7: #{net_forward.5} parent=0 // pred_check_branch
    %11 = sbr.rel (0) target = $region9
  $region8: #{net_forward.5} parent=0 // pred_region
    _
  $region9: #{net_forward.5} parent=0 // pred_fallthru
    _
  // Predicated region
  $region10: #{net_forward.5} parent=0 // pred_check
    _
  $region11: #{net_forward.5} parent=0 // pred_check_branch
    %13 = sbr.rel (0) target = $region13
  $region12: #{net_forward.5} parent=0 // pred_region
    _
  $region13: #{net_forward.5} parent=0 // pred_fallthru
    _
  %p14 = scmp.eq.s32.totalorder 0, 0
  // Predicated region
  $region14: #{net_forward.5} parent=0 // pred_check
    %p15 = pneg %p14
  $region15: #{net_forward.5} parent=0 // pred_check_branch
    %17 = sbr.rel (%p15) target = $region17
  $region16: #{net_forward.5} parent=0 // pred_region
    %18 = vst [vmem:[#allocation2] sm:$0xff] 0.0
    %19 = vst [vmem:[#allocation2 + $0x8] sm:$0xff] 0.0
    %20 = vst [vmem:[#allocation2 + $0x10] sm:$0xff] 0.0
    %21 = vst [vmem:[#allocation2 + $0x18] sm:$0xff] 0.0
    %22 = vst [vmem:[#allocation2 + $0x20] sm:$0xff] 0.0
    %23 = vst [vmem:[#allocation2 + $0x28] sm:$0xff] 0.0
    %24 = vst [vmem:[#allocation2 + $0x30] sm:$0xff] 0.0
    %25 = vst [vmem:[#allocation2 + $0x38] sm:$0xff] 0.0
    %26 = vst [vmem:[#allocation2 + $0x40] sm:$0xff] 0.0
    %27 = vst [vmem:[#allocation2 + $0x48] sm:$0xff] 0.0
    %28 = vst [vmem:[#allocation2 + $0x50] sm:$0xff] 0.0
    %29 = vst [vmem:[#allocation2 + $0x58] sm:$0xff] 0.0
    %30 = vst [vmem:[#allocation2 + $0x60] sm:$0xff] 0.0
    %31 = vst [vmem:[#allocation2 + $0x68] sm:$0xff] 0.0
    %32 = vst [vmem:[#allocation2 + $0x70] sm:$0xff] 0.0
    %33 = vst [vmem:[#allocation2 + $0x78] sm:$0xff] 0.0
    %34 = vst [vmem:[#allocation2 + $0x80] sm:$0xff] 0.0
    %35 = vst [vmem:[#allocation2 + $0x88] sm:$0xff] 0.0
    %36 = vst [vmem:[#allocation2 + $0x90] sm:$0xff] 0.0
    %37 = vst [vmem:[#allocation2 + $0x98] sm:$0xff] 0.0
    %38 = vst [vmem:[#allocation2 + $0xa0] sm:$0xff] 0.0
    %39 = vst [vmem:[#allocation2 + $0xa8] sm:$0xff] 0.0
    %40 = vst [vmem:[#allocation2 + $0xb0] sm:$0xff] 0.0
    %41 = vst [vmem:[#allocation2 + $0xb8] sm:$0xff] 0.0
    %42 = vst [vmem:[#allocation2 + $0xc0] sm:$0xff] 0.0
    %43 = vst [vmem:[#allocation2 + $0xc8] sm:$0xff] 0.0
    %44 = vst [vmem:[#allocation2 + $0xd0] sm:$0xff] 0.0
    %45 = vst [vmem:[#allocation2 + $0xd8] sm:$0xff] 0.0
    %46 = vst [vmem:[#allocation2 + $0xe0] sm:$0xff] 0.0
    %47 = vst [vmem:[#allocation2 + $0xe8] sm:$0xff] 0.0
    %48 = vst [vmem:[#allocation2 + $0xf0] sm:$0xff] 0.0
    %49 = vst [vmem:[#allocation2 + $0xf8] sm:$0xff] 0.0
  $region17: #{net_forward.5} parent=0 // pred_fallthru
    _
  %v50 = vld [vmem:[#allocation2] sm:$0xff]
  %v51 = vld [vmem:[#allocation2 + $0x8] sm:$0xff]
  %v52 = vld [vmem:[#allocation2 + $0x10] sm:$0xff]
  %v53 = vld [vmem:[#allocation2 + $0x18] sm:$0xff]
  %v54 = vld [vmem:[#allocation2 + $0x20] sm:$0xff]
  %v55 = vld [vmem:[#allocation2 + $0x28] sm:$0xff]
  %v56 = vld [vmem:[#allocation2 + $0x30] sm:$0xff]
  %v57 = vld [vmem:[#allocation2 + $0x38] sm:$0xff]
  %v58 = vld [vmem:[#allocation2 + $0x40] sm:$0xff]
  %v59 = vld [vmem:[#allocation2 + $0x48] sm:$0xff]
  %v60 = vld [vmem:[#allocation2 + $0x50] sm:$0xff]
  %v61 = vld [vmem:[#allocation2 + $0x58] sm:$0xff]
  %v62 = vld [vmem:[#allocation2 + $0x60] sm:$0xff]
  %v63 = vld [vmem:[#allocation2 + $0x68] sm:$0xff]
  %v64 = vld [vmem:[#allocation2 + $0x70] sm:$0xff]
  %v65 = vld [vmem:[#allocation2 + $0x78] sm:$0xff]
  %v66 = vld [vmem:[#allocation2 + $0x80] sm:$0xff]
  %v67 = vld [vmem:[#allocation2 + $0x88] sm:$0xff]
  %v68 = vld [vmem:[#allocation2 + $0x90] sm:$0xff]
  %v69 = vld [vmem:[#allocation2 + $0x98] sm:$0xff]
  %v70 = vld [vmem:[#allocation2 + $0xa0] sm:$0xff]
  %v71 = vld [vmem:[#allocation2 + $0xa8] sm:$0xff]
  %v72 = vld [vmem:[#allocation2 + $0xb0] sm:$0xff]
  %v73 = vld [vmem:[#allocation2 + $0xb8] sm:$0xff]
  %v74 = vld [vmem:[#allocation2 + $0xc0] sm:$0xff]
  %v75 = vld [vmem:[#allocation2 + $0xc8] sm:$0xff]
  %v76 = vld [vmem:[#allocation2 + $0xd0] sm:$0xff]
  %v77 = vld [vmem:[#allocation2 + $0xd8] sm:$0xff]
  %v78 = vld [vmem:[#allocation2 + $0xe0] sm:$0xff]
  %v79 = vld [vmem:[#allocation2 + $0xe8] sm:$0xff]
  %v80 = vld [vmem:[#allocation2 + $0xf0] sm:$0xff]
  %v81 = vld [vmem:[#allocation2 + $0xf8] sm:$0xff]
  %v82 = vld [vmem:[%s0] sm:$0xff]
  %v83 = vld [vmem:[%s0 + $0x8] sm:$0xff]
  %v84 = vld [vmem:[%s0 + $0x10] sm:$0xff]
  %v85 = vld [vmem:[%s0 + $0x18] sm:$0xff]
  %v86 = vld [vmem:[%s0 + $0x20] sm:$0xff]
  %v87 = vld [vmem:[%s0 + $0x28] sm:$0xff]
  %v88 = vld [vmem:[%s0 + $0x30] sm:$0xff]
  %v89 = vld [vmem:[%s0 + $0x38] sm:$0xff]
  %v90 = vld [vmem:[%s0 + $0x40] sm:$0xff]
  %v91 = vld [vmem:[%s0 + $0x48] sm:$0xff]
  %v92 = vld [vmem:[%s0 + $0x50] sm:$0xff]
  %v93 = vld [vmem:[%s0 + $0x58] sm:$0xff]
  %v94 = vld [vmem:[%s0 + $0x60] sm:$0xff]
  %v95 = vld [vmem:[%s0 + $0x68] sm:$0xff]
  %v96 = vld [vmem:[%s0 + $0x70] sm:$0xff]
  %v97 = vld [vmem:[%s0 + $0x78] sm:$0xff]
  %v98 = vld [vmem:[%s0 + $0x80] sm:$0xff]
  %v99 = vld [vmem:[%s0 + $0x88] sm:$0xff]
  %v100 = vld [vmem:[%s0 + $0x90] sm:$0xff]
  %v101 = vld [vmem:[%s0 + $0x98] sm:$0xff]
  %v102 = vld [vmem:[%s0 + $0xa0] sm:$0xff]
  %v103 = vld [vmem:[%s0 + $0xa8] sm:$0xff]
  %v104 = vld [vmem:[%s0 + $0xb0] sm:$0xff]
  %v105 = vld [vmem:[%s0 + $0xb8] sm:$0xff]
  %v106 = vld [vmem:[%s0 + $0xc0] sm:$0xff]
  %v107 = vld [vmem:[%s0 + $0xc8] sm:$0xff]
  %v108 = vld [vmem:[%s0 + $0xd0] sm:$0xff]
  %v109 = vld [vmem:[%s0 + $0xd8] sm:$0xff]
  %v110 = vld [vmem:[%s0 + $0xe0] sm:$0xff]
  %v111 = vld [vmem:[%s0 + $0xe8] sm:$0xff]
  %v112 = vld [vmem:[%s0 + $0xf0] sm:$0xff]
  %v113 = vld [vmem:[%s0 + $0xf8] sm:$0xff]
  %v114 = vld [vmem:[%s1] sm:$0xf]
  %v115 = vld [vmem:[%s1 + $0x4] sm:$0xf]
  %v116 = vld [vmem:[%s1 + $0x8] sm:$0xf]
  %v117 = vld [vmem:[%s1 + $0xc] sm:$0xf]
  %v118 = vld [vmem:[%s1 + $0x10] sm:$0xf]
  %v119 = vld [vmem:[%s1 + $0x14] sm:$0xf]
  %v120 = vld [vmem:[%s1 + $0x18] sm:$0xf]
  %v121 = vld [vmem:[%s1 + $0x1c] sm:$0xf]
  %v122 = vld [vmem:[%s1 + $0x20] sm:$0xf]
  %v123 = vld [vmem:[%s1 + $0x24] sm:$0xf]
  %v124 = vld [vmem:[%s1 + $0x28] sm:$0xf]
  %v125 = vld [vmem:[%s1 + $0x2c] sm:$0xf]
  %v126 = vld [vmem:[%s1 + $0x30] sm:$0xf]
  %v127 = vld [vmem:[%s1 + $0x34] sm:$0xf]
  %v128 = vld [vmem:[%s1 + $0x38] sm:$0xf]
  %v129 = vld [vmem:[%s1 + $0x3c] sm:$0xf]
  %v130 = vld [vmem:[%s1 + $0x40] sm:$0xf]
  %v131 = vld [vmem:[%s1 + $0x44] sm:$0xf]
  %v132 = vld [vmem:[%s1 + $0x48] sm:$0xf]
  %v133 = vld [vmem:[%s1 + $0x4c] sm:$0xf]
  %v134 = vld [vmem:[%s1 + $0x50] sm:$0xf]
  %v135 = vld [vmem:[%s1 + $0x54] sm:$0xf]
  %v136 = vld [vmem:[%s1 + $0x58] sm:$0xf]
  %v137 = vld [vmem:[%s1 + $0x5c] sm:$0xf]
  %v138 = vld [vmem:[%s1 + $0x60] sm:$0xf]
  %v139 = vld [vmem:[%s1 + $0x64] sm:$0xf]
  %v140 = vld [vmem:[%s1 + $0x68] sm:$0xf]
  %v141 = vld [vmem:[%s1 + $0x6c] sm:$0xf]
  %v142 = vld [vmem:[%s1 + $0x70] sm:$0xf]
  %v143 = vld [vmem:[%s1 + $0x74] sm:$0xf]
  %v144 = vld [vmem:[%s1 + $0x78] sm:$0xf]
  %v145 = vld [vmem:[%s1 + $0x7c] sm:$0xf]
  %v178 = vunpack.c.l.b16 %v82
  %v179 = vunpack.c.h.b16 %v82
  %v180 = vunpack.c.l.b16 %v83
  %v181 = vunpack.c.h.b16 %v83
  %v182 = vunpack.c.l.b16 %v84
  %v183 = vunpack.c.h.b16 %v84
  %v184 = vunpack.c.l.b16 %v85
  %v185 = vunpack.c.h.b16 %v85
  %v186 = vunpack.c.l.b16 %v86
  %v187 = vunpack.c.h.b16 %v86
  %v188 = vunpack.c.l.b16 %v87
  %v189 = vunpack.c.h.b16 %v87
  %v190 = vunpack.c.l.b16 %v88
  %v191 = vunpack.c.h.b16 %v88
  %v192 = vunpack.c.l.b16 %v89
  %v193 = vunpack.c.h.b16 %v89
  %v194 = vunpack.c.l.b16 %v90
  %v195 = vunpack.c.h.b16 %v90
  %v196 = vunpack.c.l.b16 %v91
  %v197 = vunpack.c.h.b16 %v91
  %v198 = vunpack.c.l.b16 %v92
  %v199 = vunpack.c.h.b16 %v92
  %v200 = vunpack.c.l.b16 %v93
  %v201 = vunpack.c.h.b16 %v93
  %v202 = vunpack.c.l.b16 %v94
  %v203 = vunpack.c.h.b16 %v94
  %v204 = vunpack.c.l.b16 %v95
  %v205 = vunpack.c.h.b16 %v95
  %v206 = vunpack.c.l.b16 %v96
  %v207 = vunpack.c.h.b16 %v96
  %v208 = vunpack.c.l.b16 %v97
  %v209 = vunpack.c.h.b16 %v97
  %v210 = vunpack.c.l.b16 %v98
  %v211 = vunpack.c.h.b16 %v98
  %v212 = vunpack.c.l.b16 %v99
  %v213 = vunpack.c.h.b16 %v99
  %v214 = vunpack.c.l.b16 %v100
  %v215 = vunpack.c.h.b16 %v100
  %v216 = vunpack.c.l.b16 %v101
  %v217 = vunpack.c.h.b16 %v101
  %v218 = vunpack.c.l.b16 %v102
  %v219 = vunpack.c.h.b16 %v102
  %v220 = vunpack.c.l.b16 %v103
  %v221 = vunpack.c.h.b16 %v103
  %v222 = vunpack.c.l.b16 %v104
  %v223 = vunpack.c.h.b16 %v104
  %v224 = vunpack.c.l.b16 %v105
  %v225 = vunpack.c.h.b16 %v105
  %v226 = vunpack.c.l.b16 %v106
  %v227 = vunpack.c.h.b16 %v106
  %v228 = vunpack.c.l.b16 %v107
  %v229 = vunpack.c.h.b16 %v107
  %v230 = vunpack.c.l.b16 %v108
  %v231 = vunpack.c.h.b16 %v108
  %v232 = vunpack.c.l.b16 %v109
  %v233 = vunpack.c.h.b16 %v109
  %v234 = vunpack.c.l.b16 %v110
  %v235 = vunpack.c.h.b16 %v110
  %v236 = vunpack.c.l.b16 %v111
  %v237 = vunpack.c.h.b16 %v111
  %v238 = vunpack.c.l.b16 %v112
  %v239 = vunpack.c.h.b16 %v112
  %v240 = vunpack.c.l.b16 %v113
  %v241 = vunpack.c.h.b16 %v113
  %v242 = vpack.c.b16 %v180, %v178
  %v243 = vpack.c.b16 %v181, %v179
  %v244 = vpack.c.b16 %v184, %v182
  %v245 = vpack.c.b16 %v185, %v183
  %v246 = vpack.c.b16 %v188, %v186
  %v247 = vpack.c.b16 %v189, %v187
  %v248 = vpack.c.b16 %v192, %v190
  %v249 = vpack.c.b16 %v193, %v191
  %v250 = vpack.c.b16 %v196, %v194
  %v251 = vpack.c.b16 %v197, %v195
  %v252 = vpack.c.b16 %v200, %v198
  %v253 = vpack.c.b16 %v201, %v199
  %v254 = vpack.c.b16 %v204, %v202
  %v255 = vpack.c.b16 %v205, %v203
  %v256 = vpack.c.b16 %v208, %v206
  %v257 = vpack.c.b16 %v209, %v207
  %v258 = vpack.c.b16 %v212, %v210
  %v259 = vpack.c.b16 %v213, %v211
  %v260 = vpack.c.b16 %v216, %v214
  %v261 = vpack.c.b16 %v217, %v215
  %v262 = vpack.c.b16 %v220, %v218
  %v263 = vpack.c.b16 %v221, %v219
  %v264 = vpack.c.b16 %v224, %v222
  %v265 = vpack.c.b16 %v225, %v223
  %v266 = vpack.c.b16 %v228, %v226
  %v267 = vpack.c.b16 %v229, %v227
  %v268 = vpack.c.b16 %v232, %v230
  %v269 = vpack.c.b16 %v233, %v231
  %v270 = vpack.c.b16 %v236, %v234
  %v271 = vpack.c.b16 %v237, %v235
  %v272 = vpack.c.b16 %v240, %v238
  %v273 = vpack.c.b16 %v241, %v239
  %v338 = vunpack.c.l.b16 %v114
  %v339 = vunpack.c.l.b16 %v115
  %v340 = vunpack.c.l.b16 %v116
  %v341 = vunpack.c.l.b16 %v117
  %v342 = vunpack.c.l.b16 %v118
  %v343 = vunpack.c.l.b16 %v119
  %v344 = vunpack.c.l.b16 %v120
  %v345 = vunpack.c.l.b16 %v121
  %v346 = vunpack.c.l.b16 %v122
  %v347 = vunpack.c.l.b16 %v123
  %v348 = vunpack.c.l.b16 %v124
  %v349 = vunpack.c.l.b16 %v125
  %v350 = vunpack.c.l.b16 %v126
  %v351 = vunpack.c.l.b16 %v127
  %v352 = vunpack.c.l.b16 %v128
  %v353 = vunpack.c.l.b16 %v129
  %v354 = vunpack.c.l.b16 %v130
  %v355 = vunpack.c.l.b16 %v131
  %v356 = vunpack.c.l.b16 %v132
  %v357 = vunpack.c.l.b16 %v133
  %v358 = vunpack.c.l.b16 %v134
  %v359 = vunpack.c.l.b16 %v135
  %v360 = vunpack.c.l.b16 %v136
  %v361 = vunpack.c.l.b16 %v137
  %v362 = vunpack.c.l.b16 %v138
  %v363 = vunpack.c.l.b16 %v139
  %v364 = vunpack.c.l.b16 %v140
  %v365 = vunpack.c.l.b16 %v141
  %v366 = vunpack.c.l.b16 %v142
  %v367 = vunpack.c.l.b16 %v143
  %v368 = vunpack.c.l.b16 %v144
  %v369 = vunpack.c.l.b16 %v145
  %v370 = vpack.c.b16 %v339, %v338
  %v371 = vpack.c.b16 %v341, %v340
  %v372 = vpack.c.b16 %v343, %v342
  %v373 = vpack.c.b16 %v345, %v344
  %v374 = vpack.c.b16 %v347, %v346
  %v375 = vpack.c.b16 %v349, %v348
  %v376 = vpack.c.b16 %v351, %v350
  %v377 = vpack.c.b16 %v353, %v352
  %v378 = vpack.c.b16 %v355, %v354
  %v379 = vpack.c.b16 %v357, %v356
  %v380 = vpack.c.b16 %v359, %v358
  %v381 = vpack.c.b16 %v361, %v360
  %v382 = vpack.c.b16 %v363, %v362
  %v383 = vpack.c.b16 %v365, %v364
  %v384 = vpack.c.b16 %v367, %v366
  %v385 = vpack.c.b16 %v369, %v368
  %402 = vmatpush.bf16.msra.mxu0 %v377
  %403 = vmatpush.bf16.msra.mxu0 %v376
  %404 = vmatpush.bf16.msra.mxu0 %v375
  %405 = vmatpush.bf16.msra.mxu0 %v374
  %406 = vmatpush.bf16.msra.mxu0 %v373
  %407 = vmatpush.bf16.msra.mxu0 %v372
  %408 = vmatpush.bf16.msra.mxu0 %v371
  %409 = vmatpush.bf16.msra.mxu0 %v370
  %410 = vmatmul.bf16.gmra.mxu0 %v242
  %v411 = vpop.f32.mrf.mxu0
  %v412 = vadd.f32 0.0, %v411
  %v413 = vpop.f32.mrf.mxu0
  %v414 = vadd.f32 0.0, %v413
  %415 = vmatmul.bf16.gmra.mxu0 %v244
  %v416 = vpop.f32.mrf.mxu0
  %v417 = vadd.f32 0.0, %v416
  %v418 = vpop.f32.mrf.mxu0
  %v419 = vadd.f32 0.0, %v418
  %420 = vmatmul.bf16.gmra.mxu0 %v246
  %v421 = vpop.f32.mrf.mxu0
  %v422 = vadd.f32 0.0, %v421
  %v423 = vpop.f32.mrf.mxu0
  %v424 = vadd.f32 0.0, %v423
  %425 = vmatmul.bf16.gmra.mxu0 %v248
  %v426 = vpop.f32.mrf.mxu0
  %v427 = vadd.f32 0.0, %v426
  %v428 = vpop.f32.mrf.mxu0
  %v429 = vadd.f32 0.0, %v428
  %430 = vmatmul.bf16.gmra.mxu0 %v250
  %v431 = vpop.f32.mrf.mxu0
  %v432 = vadd.f32 0.0, %v431
  %v433 = vpop.f32.mrf.mxu0
  %v434 = vadd.f32 0.0, %v433
  %435 = vmatmul.bf16.gmra.mxu0 %v252
  %v436 = vpop.f32.mrf.mxu0
  %v437 = vadd.f32 0.0, %v436
  %v438 = vpop.f32.mrf.mxu0
  %v439 = vadd.f32 0.0, %v438
  %440 = vmatmul.bf16.gmra.mxu0 %v254
  %v441 = vpop.f32.mrf.mxu0
  %v442 = vadd.f32 0.0, %v441
  %v443 = vpop.f32.mrf.mxu0
  %v444 = vadd.f32 0.0, %v443
  %445 = vmatmul.bf16.gmra.mxu0 %v256
  %v446 = vpop.f32.mrf.mxu0
  %v447 = vadd.f32 0.0, %v446
  %v448 = vpop.f32.mrf.mxu0
  %v449 = vadd.f32 0.0, %v448
  %450 = vmatmul.bf16.gmra.mxu0 %v258
  %v451 = vpop.f32.mrf.mxu0
  %v452 = vadd.f32 0.0, %v451
  %v453 = vpop.f32.mrf.mxu0
  %v454 = vadd.f32 0.0, %v453
  %455 = vmatmul.bf16.gmra.mxu0 %v260
  %v456 = vpop.f32.mrf.mxu0
  %v457 = vadd.f32 0.0, %v456
  %v458 = vpop.f32.mrf.mxu0
  %v459 = vadd.f32 0.0, %v458
  %460 = vmatmul.bf16.gmra.mxu0 %v262
  %v461 = vpop.f32.mrf.mxu0
  %v462 = vadd.f32 0.0, %v461
  %v463 = vpop.f32.mrf.mxu0
  %v464 = vadd.f32 0.0, %v463
  %465 = vmatmul.bf16.gmra.mxu0 %v264
  %v466 = vpop.f32.mrf.mxu0
  %v467 = vadd.f32 0.0, %v466
  %v468 = vpop.f32.mrf.mxu0
  %v469 = vadd.f32 0.0, %v468
  %470 = vmatmul.bf16.gmra.mxu0 %v266
  %v471 = vpop.f32.mrf.mxu0
  %v472 = vadd.f32 0.0, %v471
  %v473 = vpop.f32.mrf.mxu0
  %v474 = vadd.f32 0.0, %v473
  %475 = vmatmul.bf16.gmra.mxu0 %v268
  %v476 = vpop.f32.mrf.mxu0
  %v477 = vadd.f32 0.0, %v476
  %v478 = vpop.f32.mrf.mxu0
  %v479 = vadd.f32 0.0, %v478
  %480 = vmatmul.bf16.gmra.mxu0 %v270
  %v481 = vpop.f32.mrf.mxu0
  %v482 = vadd.f32 0.0, %v481
  %v483 = vpop.f32.mrf.mxu0
  %v484 = vadd.f32 0.0, %v483
  %485 = vmatmul.bf16.gmra.mxu0 %v272
  %v486 = vpop.f32.mrf.mxu0
  %v487 = vadd.f32 0.0, %v486
  %v488 = vpop.f32.mrf.mxu0
  %v489 = vadd.f32 0.0, %v488
  %490 = vdwg.mxu0
  %491 = vmatpush.bf16.msra.mxu0 %v385
  %492 = vmatpush.bf16.msra.mxu0 %v384
  %493 = vmatpush.bf16.msra.mxu0 %v383
  %494 = vmatpush.bf16.msra.mxu0 %v382
  %495 = vmatpush.bf16.msra.mxu0 %v381
  %496 = vmatpush.bf16.msra.mxu0 %v380
  %497 = vmatpush.bf16.msra.mxu0 %v379
  %498 = vmatpush.bf16.msra.mxu0 %v378
  %499 = vmatmul.bf16.gmra.mxu0 %v243
  %v500 = vpop.f32.mrf.mxu0
  %v501 = vadd.f32 %v412, %v500
  %v502 = vpop.f32.mrf.mxu0
  %v503 = vadd.f32 %v414, %v502
  %504 = vmatmul.bf16.gmra.mxu0 %v245
  %v505 = vpop.f32.mrf.mxu0
  %v506 = vadd.f32 %v417, %v505
  %v507 = vpop.f32.mrf.mxu0
  %v508 = vadd.f32 %v419, %v507
  %509 = vmatmul.bf16.gmra.mxu0 %v247
  %v510 = vpop.f32.mrf.mxu0
  %v511 = vadd.f32 %v422, %v510
  %v512 = vpop.f32.mrf.mxu0
  %v513 = vadd.f32 %v424, %v512
  %514 = vmatmul.bf16.gmra.mxu0 %v249
  %v515 = vpop.f32.mrf.mxu0
  %v516 = vadd.f32 %v427, %v515
  %v517 = vpop.f32.mrf.mxu0
  %v518 = vadd.f32 %v429, %v517
  %519 = vmatmul.bf16.gmra.mxu0 %v251
  %v520 = vpop.f32.mrf.mxu0
  %v521 = vadd.f32 %v432, %v520
  %v522 = vpop.f32.mrf.mxu0
  %v523 = vadd.f32 %v434, %v522
  %524 = vmatmul.bf16.gmra.mxu0 %v253
  %v525 = vpop.f32.mrf.mxu0
  %v526 = vadd.f32 %v437, %v525
  %v527 = vpop.f32.mrf.mxu0
  %v528 = vadd.f32 %v439, %v527
  %529 = vmatmul.bf16.gmra.mxu0 %v255
  %v530 = vpop.f32.mrf.mxu0
  %v531 = vadd.f32 %v442, %v530
  %v532 = vpop.f32.mrf.mxu0
  %v533 = vadd.f32 %v444, %v532
  %534 = vmatmul.bf16.gmra.mxu0 %v257
  %v535 = vpop.f32.mrf.mxu0
  %v536 = vadd.f32 %v447, %v535
  %v537 = vpop.f32.mrf.mxu0
  %v538 = vadd.f32 %v449, %v537
  %539 = vmatmul.bf16.gmra.mxu0 %v259
  %v540 = vpop.f32.mrf.mxu0
  %v541 = vadd.f32 %v452, %v540
  %v542 = vpop.f32.mrf.mxu0
  %v543 = vadd.f32 %v454, %v542
  %544 = vmatmul.bf16.gmra.mxu0 %v261
  %v545 = vpop.f32.mrf.mxu0
  %v546 = vadd.f32 %v457, %v545
  %v547 = vpop.f32.mrf.mxu0
  %v548 = vadd.f32 %v459, %v547
  %549 = vmatmul.bf16.gmra.mxu0 %v263
  %v550 = vpop.f32.mrf.mxu0
  %v551 = vadd.f32 %v462, %v550
  %v552 = vpop.f32.mrf.mxu0
  %v553 = vadd.f32 %v464, %v552
  %554 = vmatmul.bf16.gmra.mxu0 %v265
  %v555 = vpop.f32.mrf.mxu0
  %v556 = vadd.f32 %v467, %v555
  %v557 = vpop.f32.mrf.mxu0
  %v558 = vadd.f32 %v469, %v557
  %559 = vmatmul.bf16.gmra.mxu0 %v267
  %v560 = vpop.f32.mrf.mxu0
  %v561 = vadd.f32 %v472, %v560
  %v562 = vpop.f32.mrf.mxu0
  %v563 = vadd.f32 %v474, %v562
  %564 = vmatmul.bf16.gmra.mxu0 %v269
  %v565 = vpop.f32.mrf.mxu0
  %v566 = vadd.f32 %v477, %v565
  %v567 = vpop.f32.mrf.mxu0
  %v568 = vadd.f32 %v479, %v567
  %569 = vmatmul.bf16.gmra.mxu0 %v271
  %v570 = vpop.f32.mrf.mxu0
  %v571 = vadd.f32 %v482, %v570
  %v572 = vpop.f32.mrf.mxu0
  %v573 = vadd.f32 %v484, %v572
  %574 = vmatmul.bf16.gmra.mxu0 %v273
  %v575 = vpop.f32.mrf.mxu0
  %v576 = vadd.f32 %v487, %v575
  %v577 = vpop.f32.mrf.mxu0
  %v578 = vadd.f32 %v489, %v577
  %579 = vdwg.mxu0
  %v580 = vadd.f32 %v50, %v501
  %v581 = vadd.f32 %v51, %v503
  %v582 = vadd.f32 %v52, %v506
  %v583 = vadd.f32 %v53, %v508
  %v584 = vadd.f32 %v54, %v511
  %v585 = vadd.f32 %v55, %v513
  %v586 = vadd.f32 %v56, %v516
  %v587 = vadd.f32 %v57, %v518
  %v588 = vadd.f32 %v58, %v521
  %v589 = vadd.f32 %v59, %v523
  %v590 = vadd.f32 %v60, %v526
  %v591 = vadd.f32 %v61, %v528
  %v592 = vadd.f32 %v62, %v531
  %v593 = vadd.f32 %v63, %v533
  %v594 = vadd.f32 %v64, %v536
  %v595 = vadd.f32 %v65, %v538
  %v596 = vadd.f32 %v66, %v541
  %v597 = vadd.f32 %v67, %v543
  %v598 = vadd.f32 %v68, %v546
  %v599 = vadd.f32 %v69, %v548
  %v600 = vadd.f32 %v70, %v551
  %v601 = vadd.f32 %v71, %v553
  %v602 = vadd.f32 %v72, %v556
  %v603 = vadd.f32 %v73, %v558
  %v604 = vadd.f32 %v74, %v561
  %v605 = vadd.f32 %v75, %v563
  %v606 = vadd.f32 %v76, %v566
  %v607 = vadd.f32 %v77, %v568
  %v608 = vadd.f32 %v78, %v571
  %v609 = vadd.f32 %v79, %v573
  %v610 = vadd.f32 %v80, %v576
  %v611 = vadd.f32 %v81, %v578
  %612 = vst [vmem:[#allocation2] sm:$0xff] %v580
  %613 = vst [vmem:[#allocation2 + $0x8] sm:$0xff] %v581
  %614 = vst [vmem:[#allocation2 + $0x10] sm:$0xff] %v582
  %615 = vst [vmem:[#allocation2 + $0x18] sm:$0xff] %v583
  %616 = vst [vmem:[#allocation2 + $0x20] sm:$0xff] %v584
  %617 = vst [vmem:[#allocation2 + $0x28] sm:$0xff] %v585
  %618 = vst [vmem:[#allocation2 + $0x30] sm:$0xff] %v586
  %619 = vst [vmem:[#allocation2 + $0x38] sm:$0xff] %v587
  %620 = vst [vmem:[#allocation2 + $0x40] sm:$0xff] %v588
  %621 = vst [vmem:[#allocation2 + $0x48] sm:$0xff] %v589
  %622 = vst [vmem:[#allocation2 + $0x50] sm:$0xff] %v590
  %623 = vst [vmem:[#allocation2 + $0x58] sm:$0xff] %v591
  %624 = vst [vmem:[#allocation2 + $0x60] sm:$0xff] %v592
  %625 = vst [vmem:[#allocation2 + $0x68] sm:$0xff] %v593
  %626 = vst [vmem:[#allocation2 + $0x70] sm:$0xff] %v594
  %627 = vst [vmem:[#allocation2 + $0x78] sm:$0xff] %v595
  %628 = vst [vmem:[#allocation2 + $0x80] sm:$0xff] %v596
  %629 = vst [vmem:[#allocation2 + $0x88] sm:$0xff] %v597
  %630 = vst [vmem:[#allocation2 + $0x90] sm:$0xff] %v598
  %631 = vst [vmem:[#allocation2 + $0x98] sm:$0xff] %v599
  %632 = vst [vmem:[#allocation2 + $0xa0] sm:$0xff] %v600
  %633 = vst [vmem:[#allocation2 + $0xa8] sm:$0xff] %v601
  %634 = vst [vmem:[#allocation2 + $0xb0] sm:$0xff] %v602
  %635 = vst [vmem:[#allocation2 + $0xb8] sm:$0xff] %v603
  %636 = vst [vmem:[#allocation2 + $0xc0] sm:$0xff] %v604
  %637 = vst [vmem:[#allocation2 + $0xc8] sm:$0xff] %v605
  %638 = vst [vmem:[#allocation2 + $0xd0] sm:$0xff] %v606
  %639 = vst [vmem:[#allocation2 + $0xd8] sm:$0xff] %v607
  %640 = vst [vmem:[#allocation2 + $0xe0] sm:$0xff] %v608
  %641 = vst [vmem:[#allocation2 + $0xe8] sm:$0xff] %v609
  %642 = vst [vmem:[#allocation2 + $0xf0] sm:$0xff] %v610
  %643 = vst [vmem:[#allocation2 + $0xf8] sm:$0xff] %v611
  // Predicated region
  $region18: #{net_forward.5} parent=0 // pred_check
    %p644 = pneg %p14
  $region19: #{net_forward.5} parent=0 // pred_check_branch
    %646 = sbr.rel (%p644) target = $region21
  $region20: #{net_forward.5} parent=0 // pred_region
    %v647 = vld [vmem:[#allocation2] sm:$0xff]
    %v648 = vld [vmem:[#allocation2 + $0x8] sm:$0xff]
    %v649 = vld [vmem:[#allocation2 + $0x10] sm:$0xff]
    %v650 = vld [vmem:[#allocation2 + $0x18] sm:$0xff]
    %v651 = vld [vmem:[#allocation2 + $0x20] sm:$0xff]
    %v652 = vld [vmem:[#allocation2 + $0x28] sm:$0xff]
    %v653 = vld [vmem:[#allocation2 + $0x30] sm:$0xff]
    %v654 = vld [vmem:[#allocation2 + $0x38] sm:$0xff]
    %v655 = vld [vmem:[#allocation2 + $0x40] sm:$0xff]
    %v656 = vld [vmem:[#allocation2 + $0x48] sm:$0xff]
    %v657 = vld [vmem:[#allocation2 + $0x50] sm:$0xff]
    %v658 = vld [vmem:[#allocation2 + $0x58] sm:$0xff]
    %v659 = vld [vmem:[#allocation2 + $0x60] sm:$0xff]
    %v660 = vld [vmem:[#allocation2 + $0x68] sm:$0xff]
    %v661 = vld [vmem:[#allocation2 + $0x70] sm:$0xff]
    %v662 = vld [vmem:[#allocation2 + $0x78] sm:$0xff]
    %v663 = vld [vmem:[#allocation2 + $0x80] sm:$0xff]
    %v664 = vld [vmem:[#allocation2 + $0x88] sm:$0xff]
    %v665 = vld [vmem:[#allocation2 + $0x90] sm:$0xff]
    %v666 = vld [vmem:[#allocation2 + $0x98] sm:$0xff]
    %v667 = vld [vmem:[#allocation2 + $0xa0] sm:$0xff]
    %v668 = vld [vmem:[#allocation2 + $0xa8] sm:$0xff]
    %v669 = vld [vmem:[#allocation2 + $0xb0] sm:$0xff]
    %v670 = vld [vmem:[#allocation2 + $0xb8] sm:$0xff]
    %v671 = vld [vmem:[#allocation2 + $0xc0] sm:$0xff]
    %v672 = vld [vmem:[#allocation2 + $0xc8] sm:$0xff]
    %v673 = vld [vmem:[#allocation2 + $0xd0] sm:$0xff]
    %v674 = vld [vmem:[#allocation2 + $0xd8] sm:$0xff]
    %v675 = vld [vmem:[#allocation2 + $0xe0] sm:$0xff]
    %v676 = vld [vmem:[#allocation2 + $0xe8] sm:$0xff]
    %v677 = vld [vmem:[#allocation2 + $0xf0] sm:$0xff]
    %v678 = vld [vmem:[#allocation2 + $0xf8] sm:$0xff]
    %v679 = vld [vmem:[%s2] sm:$0xff]
    %v680 = vld [vmem:[%s2 + $0x8] sm:$0xff]
    %v681 = vld [vmem:[%s2 + $0x10] sm:$0xff]
    %v682 = vld [vmem:[%s2 + $0x18] sm:$0xff]
    %v683 = vld [vmem:[%s2 + $0x20] sm:$0xff]
    %v684 = vld [vmem:[%s2 + $0x28] sm:$0xff]
    %v685 = vld [vmem:[%s2 + $0x30] sm:$0xff]
    %v686 = vld [vmem:[%s2 + $0x38] sm:$0xff]
    %v687 = vld [vmem:[%s2 + $0x40] sm:$0xff]
    %v688 = vld [vmem:[%s2 + $0x48] sm:$0xff]
    %v689 = vld [vmem:[%s2 + $0x50] sm:$0xff]
    %v690 = vld [vmem:[%s2 + $0x58] sm:$0xff]
    %v691 = vld [vmem:[%s2 + $0x60] sm:$0xff]
    %v692 = vld [vmem:[%s2 + $0x68] sm:$0xff]
    %v693 = vld [vmem:[%s2 + $0x70] sm:$0xff]
    %v694 = vld [vmem:[%s2 + $0x78] sm:$0xff]
    %v695 = vld [vmem:[%s2 + $0x80] sm:$0xff]
    %v696 = vld [vmem:[%s2 + $0x88] sm:$0xff]
    %v697 = vld [vmem:[%s2 + $0x90] sm:$0xff]
    %v698 = vld [vmem:[%s2 + $0x98] sm:$0xff]
    %v699 = vld [vmem:[%s2 + $0xa0] sm:$0xff]
    %v700 = vld [vmem:[%s2 + $0xa8] sm:$0xff]
    %v701 = vld [vmem:[%s2 + $0xb0] sm:$0xff]
    %v702 = vld [vmem:[%s2 + $0xb8] sm:$0xff]
    %v703 = vld [vmem:[%s2 + $0xc0] sm:$0xff]
    %v704 = vld [vmem:[%s2 + $0xc8] sm:$0xff]
    %v705 = vld [vmem:[%s2 + $0xd0] sm:$0xff]
    %v706 = vld [vmem:[%s2 + $0xd8] sm:$0xff]
    %v707 = vld [vmem:[%s2 + $0xe0] sm:$0xff]
    %v708 = vld [vmem:[%s2 + $0xe8] sm:$0xff]
    %v709 = vld [vmem:[%s2 + $0xf0] sm:$0xff]
    %v710 = vld [vmem:[%s2 + $0xf8] sm:$0xff]
    %v711 = vadd.f32 %v647, %v679
    %v712 = vadd.f32 %v648, %v680
    %v713 = vadd.f32 %v649, %v681
    %v714 = vadd.f32 %v650, %v682
    %v715 = vadd.f32 %v651, %v683
    %v716 = vadd.f32 %v652, %v684
    %v717 = vadd.f32 %v653, %v685
    %v718 = vadd.f32 %v654, %v686
    %v719 = vadd.f32 %v655, %v687
    %v720 = vadd.f32 %v656, %v688
    %v721 = vadd.f32 %v657, %v689
    %v722 = vadd.f32 %v658, %v690
    %v723 = vadd.f32 %v659, %v691
    %v724 = vadd.f32 %v660, %v692
    %v725 = vadd.f32 %v661, %v693
    %v726 = vadd.f32 %v662, %v694
    %v727 = vadd.f32 %v663, %v695
    %v728 = vadd.f32 %v664, %v696
    %v729 = vadd.f32 %v665, %v697
    %v730 = vadd.f32 %v666, %v698
    %v731 = vadd.f32 %v667, %v699
    %v732 = vadd.f32 %v668, %v700
    %v733 = vadd.f32 %v669, %v701
    %v734 = vadd.f32 %v670, %v702
    %v735 = vadd.f32 %v671, %v703
    %v736 = vadd.f32 %v672, %v704
    %v737 = vadd.f32 %v673, %v705
    %v738 = vadd.f32 %v674, %v706
    %v739 = vadd.f32 %v675, %v707
    %v740 = vadd.f32 %v676, %v708
    %v741 = vadd.f32 %v677, %v709
    %v742 = vadd.f32 %v678, %v710
    %v743 = vmax.f32 %v711, 0.0
    %v744 = vmax.f32 %v712, 0.0
    %v745 = vmax.f32 %v713, 0.0
    %v746 = vmax.f32 %v714, 0.0
    %v747 = vmax.f32 %v715, 0.0
    %v748 = vmax.f32 %v716, 0.0
    %v749 = vmax.f32 %v717, 0.0
    %v750 = vmax.f32 %v718, 0.0
    %v751 = vmax.f32 %v719, 0.0
    %v752 = vmax.f32 %v720, 0.0
    %v753 = vmax.f32 %v721, 0.0
    %v754 = vmax.f32 %v722, 0.0
    %v755 = vmax.f32 %v723, 0.0
    %v756 = vmax.f32 %v724, 0.0
    %v757 = vmax.f32 %v725, 0.0
    %v758 = vmax.f32 %v726, 0.0
    %v759 = vmax.f32 %v727, 0.0
    %v760 = vmax.f32 %v728, 0.0
    %v761 = vmax.f32 %v729, 0.0
    %v762 = vmax.f32 %v730, 0.0
    %v763 = vmax.f32 %v731, 0.0
    %v764 = vmax.f32 %v732, 0.0
    %v765 = vmax.f32 %v733, 0.0
    %v766 = vmax.f32 %v734, 0.0
    %v767 = vmax.f32 %v735, 0.0
    %v768 = vmax.f32 %v736, 0.0
    %v769 = vmax.f32 %v737, 0.0
    %v770 = vmax.f32 %v738, 0.0
    %v771 = vmax.f32 %v739, 0.0
    %v772 = vmax.f32 %v740, 0.0
    %v773 = vmax.f32 %v741, 0.0
    %v774 = vmax.f32 %v742, 0.0
    %775 = vst [vmem:[%s3] sm:$0xff] %v743
    %776 = vst [vmem:[%s3 + $0x8] sm:$0xff] %v744
    %777 = vst [vmem:[%s3 + $0x10] sm:$0xff] %v745
    %778 = vst [vmem:[%s3 + $0x18] sm:$0xff] %v746
    %779 = vst [vmem:[%s3 + $0x20] sm:$0xff] %v747
    %780 = vst [vmem:[%s3 + $0x28] sm:$0xff] %v748
    %781 = vst [vmem:[%s3 + $0x30] sm:$0xff] %v749
    %782 = vst [vmem:[%s3 + $0x38] sm:$0xff] %v750
    %783 = vst [vmem:[%s3 + $0x40] sm:$0xff] %v751
    %784 = vst [vmem:[%s3 + $0x48] sm:$0xff] %v752
    %785 = vst [vmem:[%s3 + $0x50] sm:$0xff] %v753
    %786 = vst [vmem:[%s3 + $0x58] sm:$0xff] %v754
    %787 = vst [vmem:[%s3 + $0x60] sm:$0xff] %v755
    %788 = vst [vmem:[%s3 + $0x68] sm:$0xff] %v756
    %789 = vst [vmem:[%s3 + $0x70] sm:$0xff] %v757
    %790 = vst [vmem:[%s3 + $0x78] sm:$0xff] %v758
    %791 = vst [vmem:[%s3 + $0x80] sm:$0xff] %v759
    %792 = vst [vmem:[%s3 + $0x88] sm:$0xff] %v760
    %793 = vst [vmem:[%s3 + $0x90] sm:$0xff] %v761
    %794 = vst [vmem:[%s3 + $0x98] sm:$0xff] %v762
    %795 = vst [vmem:[%s3 + $0xa0] sm:$0xff] %v763
    %796 = vst [vmem:[%s3 + $0xa8] sm:$0xff] %v764
    %797 = vst [vmem:[%s3 + $0xb0] sm:$0xff] %v765
    %798 = vst [vmem:[%s3 + $0xb8] sm:$0xff] %v766
    %799 = vst [vmem:[%s3 + $0xc0] sm:$0xff] %v767
    %800 = vst [vmem:[%s3 + $0xc8] sm:$0xff] %v768
    %801 = vst [vmem:[%s3 + $0xd0] sm:$0xff] %v769
    %802 = vst [vmem:[%s3 + $0xd8] sm:$0xff] %v770
    %803 = vst [vmem:[%s3 + $0xe0] sm:$0xff] %v771
    %804 = vst [vmem:[%s3 + $0xe8] sm:$0xff] %v772
    %805 = vst [vmem:[%s3 + $0xf0] sm:$0xff] %v773
    %806 = vst [vmem:[%s3 + $0xf8] sm:$0xff] %v774
  $region21: #{net_forward.5} parent=0 // pred_fallthru
    _
  // Predicated region
  $region22: #{net_forward.5} parent=0 // pred_check
    _
  $region23: #{net_forward.5} parent=0 // pred_check_branch
    %808 = sbr.rel (0) target = $region25
  $region24: #{net_forward.5} parent=0 // pred_region
    _
  $region25: #{net_forward.5} parent=0 // pred_fallthru
    _
  // Predicated region
  $region26: #{net_forward.5} parent=0 // pred_check
    _
  $region27: #{net_forward.5} parent=0 // pred_check_branch
    %810 = sbr.rel (0) target = $region29
  $region28: #{net_forward.5} parent=0 // pred_region
    _
  $region29: #{net_forward.5} parent=0 // pred_fallthru
    _

// kernel: net_forward.7
$region0: #{net_forward.7}
  #allocation0 [shape = 'u32[]', space=smem, size = 0x4, offset = 0x4, fixed_abs, tag = 'smem constant byte address 0x4 - core index']
  #allocation1 [shape = 'u32[72,128]{1,0:T(1,128)}', space=vmem, size = 0x9000, scoped, tag = 'internal scratch']
  #allocation2 [shape = 'f32[256,128]{1,0:T(8,128)}', space=vmem, size = 0x20000, scoped, tag = 'scratch operand']
  %s0 = inlined_call_operand.vmem [shape: bf16[256,256], index: 0, kind: input, shape index: {}]
  %s1 = inlined_call_operand.vmem [shape: bf16[256,128], index: 1, kind: input, shape index: {}]
  %s2 = inlined_call_operand.vmem [shape: f32[256,128], index: 2, kind: input, shape index: {}]
  %s3 = inlined_call_operand.vmem [shape: f32[256,128], index: 3, kind: output, shape index: {}]
  %s4 = sld [smem:[#allocation0]]
  $region30: #{net_forward.7} parent=0
    _
  %s6 = ssub.s32 1, %s4
  %s7 = scalar_select 0, %s6, %s4
  // Predicated region
  $region2: #{net_forward.7} parent=0 // pred_check
    _
  $region3: #{net_forward.7} parent=0 // pred_check_branch
    %9 = sbr.rel (0) target = $region5
  $region4: #{net_forward.7} parent=0 // pred_region
    _
  $region5: #{net_forward.7} parent=0 // pred_fallthru
    _
  // Predicated region
  $region6: #{net_forward.7} parent=0 // pred_check
    _
  $region7: #{net_forward.7} parent=0 // pred_check_branch
    %11 = sbr.rel (0) target = $region9
  $region8: #{net_forward.7} parent=0 // pred_region
    _
  $region9: #{net_forward.7} parent=0 // pred_fallthru
    _
  // Predicated region
  $region10: #{net_forward.7} parent=0 // pred_check
    _
  $region11: #{net_forward.7} parent=0 // pred_check_branch
    %13 = sbr.rel (0) target = $region13
  $region12: #{net_forward.7} parent=0 // pred_region
    _
  $region13: #{net_forward.7} parent=0 // pred_fallthru
    _
  %p14 = scmp.eq.s32.totalorder 0, 0
  // Predicated region
  $region14: #{net_forward.7} parent=0 // pred_check
    %p15 = pneg %p14
  $region15: #{net_forward.7} parent=0 // pred_check_branch
    %17 = sbr.rel (%p15) target = $region17
  $region16: #{net_forward.7} parent=0 // pred_region
    %18 = vst [vmem:[#allocation2] sm:$0xff] 0.0
    %19 = vst [vmem:[#allocation2 + $0x8] sm:$0xff] 0.0
    %20 = vst [vmem:[#allocation2 + $0x10] sm:$0xff] 0.0
    %21 = vst [vmem:[#allocation2 + $0x18] sm:$0xff] 0.0
    %22 = vst [vmem:[#allocation2 + $0x20] sm:$0xff] 0.0
    %23 = vst [vmem:[#allocation2 + $0x28] sm:$0xff] 0.0
    %24 = vst [vmem:[#allocation2 + $0x30] sm:$0xff] 0.0
    %25 = vst [vmem:[#allocation2 + $0x38] sm:$0xff] 0.0
    %26 = vst [vmem:[#allocation2 + $0x40] sm:$0xff] 0.0
    %27 = vst [vmem:[#allocation2 + $0x48] sm:$0xff] 0.0
    %28 = vst [vmem:[#allocation2 + $0x50] sm:$0xff] 0.0
    %29 = vst [vmem:[#allocation2 + $0x58] sm:$0xff] 0.0
    %30 = vst [vmem:[#allocation2 + $0x60] sm:$0xff] 0.0
    %31 = vst [vmem:[#allocation2 + $0x68] sm:$0xff] 0.0
    %32 = vst [vmem:[#allocation2 + $0x70] sm:$0xff] 0.0
    %33 = vst [vmem:[#allocation2 + $0x78] sm:$0xff] 0.0
    %34 = vst [vmem:[#allocation2 + $0x80] sm:$0xff] 0.0
    %35 = vst [vmem:[#allocation2 + $0x88] sm:$0xff] 0.0
    %36 = vst [vmem:[#allocation2 + $0x90] sm:$0xff] 0.0
    %37 = vst [vmem:[#allocation2 + $0x98] sm:$0xff] 0.0
    %38 = vst [vmem:[#allocation2 + $0xa0] sm:$0xff] 0.0
    %39 = vst [vmem:[#allocation2 + $0xa8] sm:$0xff] 0.0
    %40 = vst [vmem:[#allocation2 + $0xb0] sm:$0xff] 0.0
    %41 = vst [vmem:[#allocation2 + $0xb8] sm:$0xff] 0.0
    %42 = vst [vmem:[#allocation2 + $0xc0] sm:$0xff] 0.0
    %43 = vst [vmem:[#allocation2 + $0xc8] sm:$0xff] 0.0
    %44 = vst [vmem:[#allocation2 + $0xd0] sm:$0xff] 0.0
    %45 = vst [vmem:[#allocation2 + $0xd8] sm:$0xff] 0.0
    %46 = vst [vmem:[#allocation2 + $0xe0] sm:$0xff] 0.0
    %47 = vst [vmem:[#allocation2 + $0xe8] sm:$0xff] 0.0
    %48 = vst [vmem:[#allocation2 + $0xf0] sm:$0xff] 0.0
    %49 = vst [vmem:[#allocation2 + $0xf8] sm:$0xff] 0.0
  $region17: #{net_forward.7} parent=0 // pred_fallthru
    _
  %v50 = vld [vmem:[#allocation2] sm:$0xff]
  %v51 = vld [vmem:[#allocation2 + $0x8] sm:$0xff]
  %v52 = vld [vmem:[#allocation2 + $0x10] sm:$0xff]
  %v53 = vld [vmem:[#allocation2 + $0x18] sm:$0xff]
  %v54 = vld [vmem:[#allocation2 + $0x20] sm:$0xff]
  %v55 = vld [vmem:[#allocation2 + $0x28] sm:$0xff]
  %v56 = vld [vmem:[#allocation2 + $0x30] sm:$0xff]
  %v57 = vld [vmem:[#allocation2 + $0x38] sm:$0xff]
  %v58 = vld [vmem:[#allocation2 + $0x40] sm:$0xff]
  %v59 = vld [vmem:[#allocation2 + $0x48] sm:$0xff]
  %v60 = vld [vmem:[#allocation2 + $0x50] sm:$0xff]
  %v61 = vld [vmem:[#allocation2 + $0x58] sm:$0xff]
  %v62 = vld [vmem:[#allocation2 + $0x60] sm:$0xff]
  %v63 = vld [vmem:[#allocation2 + $0x68] sm:$0xff]
  %v64 = vld [vmem:[#allocation2 + $0x70] sm:$0xff]
  %v65 = vld [vmem:[#allocation2 + $0x78] sm:$0xff]
  %v66 = vld [vmem:[#allocation2 + $0x80] sm:$0xff]
  %v67 = vld [vmem:[#allocation2 + $0x88] sm:$0xff]
  %v68 = vld [vmem:[#allocation2 + $0x90] sm:$0xff]
  %v69 = vld [vmem:[#allocation2 + $0x98] sm:$0xff]
  %v70 = vld [vmem:[#allocation2 + $0xa0] sm:$0xff]
  %v71 = vld [vmem:[#allocation2 + $0xa8] sm:$0xff]
  %v72 = vld [vmem:[#allocation2 + $0xb0] sm:$0xff]
  %v73 = vld [vmem:[#allocation2 + $0xb8] sm:$0xff]
  %v74 = vld [vmem:[#allocation2 + $0xc0] sm:$0xff]
  %v75 = vld [vmem:[#allocation2 + $0xc8] sm:$0xff]
  %v76 = vld [vmem:[#allocation2 + $0xd0] sm:$0xff]
  %v77 = vld [vmem:[#allocation2 + $0xd8] sm:$0xff]
  %v78 = vld [vmem:[#allocation2 + $0xe0] sm:$0xff]
  %v79 = vld [vmem:[#allocation2 + $0xe8] sm:$0xff]
  %v80 = vld [vmem:[#allocation2 + $0xf0] sm:$0xff]
  %v81 = vld [vmem:[#allocation2 + $0xf8] sm:$0xff]
  %v82 = vld [vmem:[%s0] sm:$0xff]
  %v83 = vld [vmem:[%s0 + $0x8] sm:$0xff]
  %v84 = vld [vmem:[%s0 + $0x10] sm:$0xff]
  %v85 = vld [vmem:[%s0 + $0x18] sm:$0xff]
  %v86 = vld [vmem:[%s0 + $0x20] sm:$0xff]
  %v87 = vld [vmem:[%s0 + $0x28] sm:$0xff]
  %v88 = vld [vmem:[%s0 + $0x30] sm:$0xff]
  %v89 = vld [vmem:[%s0 + $0x38] sm:$0xff]
  %v90 = vld [vmem:[%s0 + $0x40] sm:$0xff]
  %v91 = vld [vmem:[%s0 + $0x48] sm:$0xff]
  %v92 = vld [vmem:[%s0 + $0x50] sm:$0xff]
  %v93 = vld [vmem:[%s0 + $0x58] sm:$0xff]
  %v94 = vld [vmem:[%s0 + $0x60] sm:$0xff]
  %v95 = vld [vmem:[%s0 + $0x68] sm:$0xff]
  %v96 = vld [vmem:[%s0 + $0x70] sm:$0xff]
  %v97 = vld [vmem:[%s0 + $0x78] sm:$0xff]
  %v98 = vld [vmem:[%s0 + $0x80] sm:$0xff]
  %v99 = vld [vmem:[%s0 + $0x88] sm:$0xff]
  %v100 = vld [vmem:[%s0 + $0x90] sm:$0xff]
  %v101 = vld [vmem:[%s0 + $0x98] sm:$0xff]
  %v102 = vld [vmem:[%s0 + $0xa0] sm:$0xff]
  %v103 = vld [vmem:[%s0 + $0xa8] sm:$0xff]
  %v104 = vld [vmem:[%s0 + $0xb0] sm:$0xff]
  %v105 = vld [vmem:[%s0 + $0xb8] sm:$0xff]
  %v106 = vld [vmem:[%s0 + $0xc0] sm:$0xff]
  %v107 = vld [vmem:[%s0 + $0xc8] sm:$0xff]
  %v108 = vld [vmem:[%s0 + $0xd0] sm:$0xff]
  %v109 = vld [vmem:[%s0 + $0xd8] sm:$0xff]
  %v110 = vld [vmem:[%s0 + $0xe0] sm:$0xff]
  %v111 = vld [vmem:[%s0 + $0xe8] sm:$0xff]
  %v112 = vld [vmem:[%s0 + $0xf0] sm:$0xff]
  %v113 = vld [vmem:[%s0 + $0xf8] sm:$0xff]
  %v114 = vld [vmem:[%s1] sm:$0xf]
  %v115 = vld [vmem:[%s1 + $0x4] sm:$0xf]
  %v116 = vld [vmem:[%s1 + $0x8] sm:$0xf]
  %v117 = vld [vmem:[%s1 + $0xc] sm:$0xf]
  %v118 = vld [vmem:[%s1 + $0x10] sm:$0xf]
  %v119 = vld [vmem:[%s1 + $0x14] sm:$0xf]
  %v120 = vld [vmem:[%s1 + $0x18] sm:$0xf]
  %v121 = vld [vmem:[%s1 + $0x1c] sm:$0xf]
  %v122 = vld [vmem:[%s1 + $0x20] sm:$0xf]
  %v123 = vld [vmem:[%s1 + $0x24] sm:$0xf]
  %v124 = vld [vmem:[%s1 + $0x28] sm:$0xf]
  %v125 = vld [vmem:[%s1 + $0x2c] sm:$0xf]
  %v126 = vld [vmem:[%s1 + $0x30] sm:$0xf]
  %v127 = vld [vmem:[%s1 + $0x34] sm:$0xf]
  %v128 = vld [vmem:[%s1 + $0x38] sm:$0xf]
  %v129 = vld [vmem:[%s1 + $0x3c] sm:$0xf]
  %v130 = vld [vmem:[%s1 + $0x40] sm:$0xf]
  %v131 = vld [vmem:[%s1 + $0x44] sm:$0xf]
  %v132 = vld [vmem:[%s1 + $0x48] sm:$0xf]
  %v133 = vld [vmem:[%s1 + $0x4c] sm:$0xf]
  %v134 = vld [vmem:[%s1 + $0x50] sm:$0xf]
  %v135 = vld [vmem:[%s1 + $0x54] sm:$0xf]
  %v136 = vld [vmem:[%s1 + $0x58] sm:$0xf]
  %v137 = vld [vmem:[%s1 + $0x5c] sm:$0xf]
  %v138 = vld [vmem:[%s1 + $0x60] sm:$0xf]
  %v139 = vld [vmem:[%s1 + $0x64] sm:$0xf]
  %v140 = vld [vmem:[%s1 + $0x68] sm:$0xf]
  %v141 = vld [vmem:[%s1 + $0x6c] sm:$0xf]
  %v142 = vld [vmem:[%s1 + $0x70] sm:$0xf]
  %v143 = vld [vmem:[%s1 + $0x74] sm:$0xf]
  %v144 = vld [vmem:[%s1 + $0x78] sm:$0xf]
  %v145 = vld [vmem:[%s1 + $0x7c] sm:$0xf]
  %v178 = vunpack.c.l.b16 %v82
  %v179 = vunpack.c.h.b16 %v82
  %v180 = vunpack.c.l.b16 %v83
  %v181 = vunpack.c.h.b16 %v83
  %v182 = vunpack.c.l.b16 %v84
  %v183 = vunpack.c.h.b16 %v84
  %v184 = vunpack.c.l.b16 %v85
  %v185 = vunpack.c.h.b16 %v85
  %v186 = vunpack.c.l.b16 %v86
  %v187 = vunpack.c.h.b16 %v86
  %v188 = vunpack.c.l.b16 %v87
  %v189 = vunpack.c.h.b16 %v87
  %v190 = vunpack.c.l.b16 %v88
  %v191 = vunpack.c.h.b16 %v88
  %v192 = vunpack.c.l.b16 %v89
  %v193 = vunpack.c.h.b16 %v89
  %v194 = vunpack.c.l.b16 %v90
  %v195 = vunpack.c.h.b16 %v90
  %v196 = vunpack.c.l.b16 %v91
  %v197 = vunpack.c.h.b16 %v91
  %v198 = vunpack.c.l.b16 %v92
  %v199 = vunpack.c.h.b16 %v92
  %v200 = vunpack.c.l.b16 %v93
  %v201 = vunpack.c.h.b16 %v93
  %v202 = vunpack.c.l.b16 %v94
  %v203 = vunpack.c.h.b16 %v94
  %v204 = vunpack.c.l.b16 %v95
  %v205 = vunpack.c.h.b16 %v95
  %v206 = vunpack.c.l.b16 %v96
  %v207 = vunpack.c.h.b16 %v96
  %v208 = vunpack.c.l.b16 %v97
  %v209 = vunpack.c.h.b16 %v97
  %v210 = vunpack.c.l.b16 %v98
  %v211 = vunpack.c.h.b16 %v98
  %v212 = vunpack.c.l.b16 %v99
  %v213 = vunpack.c.h.b16 %v99
  %v214 = vunpack.c.l.b16 %v100
  %v215 = vunpack.c.h.b16 %v100
  %v216 = vunpack.c.l.b16 %v101
  %v217 = vunpack.c.h.b16 %v101
  %v218 = vunpack.c.l.b16 %v102
  %v219 = vunpack.c.h.b16 %v102
  %v220 = vunpack.c.l.b16 %v103
  %v221 = vunpack.c.h.b16 %v103
  %v222 = vunpack.c.l.b16 %v104
  %v223 = vunpack.c.h.b16 %v104
  %v224 = vunpack.c.l.b16 %v105
  %v225 = vunpack.c.h.b16 %v105
  %v226 = vunpack.c.l.b16 %v106
  %v227 = vunpack.c.h.b16 %v106
  %v228 = vunpack.c.l.b16 %v107
  %v229 = vunpack.c.h.b16 %v107
  %v230 = vunpack.c.l.b16 %v108
  %v231 = vunpack.c.h.b16 %v108
  %v232 = vunpack.c.l.b16 %v109
  %v233 = vunpack.c.h.b16 %v109
  %v234 = vunpack.c.l.b16 %v110
  %v235 = vunpack.c.h.b16 %v110
  %v236 = vunpack.c.l.b16 %v111
  %v237 = vunpack.c.h.b16 %v111
  %v238 = vunpack.c.l.b16 %v112
  %v239 = vunpack.c.h.b16 %v112
  %v240 = vunpack.c.l.b16 %v113
  %v241 = vunpack.c.h.b16 %v113
  %v242 = vpack.c.b16 %v180, %v178
  %v243 = vpack.c.b16 %v181, %v179
  %v244 = vpack.c.b16 %v184, %v182
  %v245 = vpack.c.b16 %v185, %v183
  %v246 = vpack.c.b16 %v188, %v186
  %v247 = vpack.c.b16 %v189, %v187
  %v248 = vpack.c.b16 %v192, %v190
  %v249 = vpack.c.b16 %v193, %v191
  %v250 = vpack.c.b16 %v196, %v194
  %v251 = vpack.c.b16 %v197, %v195
  %v252 = vpack.c.b16 %v200, %v198
  %v253 = vpack.c.b16 %v201, %v199
  %v254 = vpack.c.b16 %v204, %v202
  %v255 = vpack.c.b16 %v205, %v203
  %v256 = vpack.c.b16 %v208, %v206
  %v257 = vpack.c.b16 %v209, %v207
  %v258 = vpack.c.b16 %v212, %v210
  %v259 = vpack.c.b16 %v213, %v211
  %v260 = vpack.c.b16 %v216, %v214
  %v261 = vpack.c.b16 %v217, %v215
  %v262 = vpack.c.b16 %v220, %v218
  %v263 = vpack.c.b16 %v221, %v219
  %v264 = vpack.c.b16 %v224, %v222
  %v265 = vpack.c.b16 %v225, %v223
  %v266 = vpack.c.b16 %v228, %v226
  %v267 = vpack.c.b16 %v229, %v227
  %v268 = vpack.c.b16 %v232, %v230
  %v269 = vpack.c.b16 %v233, %v231
  %v270 = vpack.c.b16 %v236, %v234
  %v271 = vpack.c.b16 %v237, %v235
  %v272 = vpack.c.b16 %v240, %v238
  %v273 = vpack.c.b16 %v241, %v239
  %v338 = vunpack.c.l.b16 %v114
  %v339 = vunpack.c.l.b16 %v115
  %v340 = vunpack.c.l.b16 %v116
  %v341 = vunpack.c.l.b16 %v117
  %v342 = vunpack.c.l.b16 %v118
  %v343 = vunpack.c.l.b16 %v119
  %v344 = vunpack.c.l.b16 %v120
  %v345 = vunpack.c.l.b16 %v121
  %v346 = vunpack.c.l.b16 %v122
  %v347 = vunpack.c.l.b16 %v123
  %v348 = vunpack.c.l.b16 %v124
  %v349 = vunpack.c.l.b16 %v125
  %v350 = vunpack.c.l.b16 %v126
  %v351 = vunpack.c.l.b16 %v127
  %v352 = vunpack.c.l.b16 %v128
  %v353 = vunpack.c.l.b16 %v129
  %v354 = vunpack.c.l.b16 %v130
  %v355 = vunpack.c.l.b16 %v131
  %v356 = vunpack.c.l.b16 %v132
  %v357 = vunpack.c.l.b16 %v133
  %v358 = vunpack.c.l.b16 %v134
  %v359 = vunpack.c.l.b16 %v135
  %v360 = vunpack.c.l.b16 %v136
  %v361 = vunpack.c.l.b16 %v137
  %v362 = vunpack.c.l.b16 %v138
  %v363 = vunpack.c.l.b16 %v139
  %v364 = vunpack.c.l.b16 %v140
  %v365 = vunpack.c.l.b16 %v141
  %v366 = vunpack.c.l.b16 %v142
  %v367 = vunpack.c.l.b16 %v143
  %v368 = vunpack.c.l.b16 %v144
  %v369 = vunpack.c.l.b16 %v145
  %v370 = vpack.c.b16 %v339, %v338
  %v371 = vpack.c.b16 %v341, %v340
  %v372 = vpack.c.b16 %v343, %v342
  %v373 = vpack.c.b16 %v345, %v344
  %v374 = vpack.c.b16 %v347, %v346
  %v375 = vpack.c.b16 %v349, %v348
  %v376 = vpack.c.b16 %v351, %v350
  %v377 = vpack.c.b16 %v353, %v352
  %v378 = vpack.c.b16 %v355, %v354
  %v379 = vpack.c.b16 %v357, %v356
  %v380 = vpack.c.b16 %v359, %v358
  %v381 = vpack.c.b16 %v361, %v360
  %v382 = vpack.c.b16 %v363, %v362
  %v383 = vpack.c.b16 %v365, %v364
  %v384 = vpack.c.b16 %v367, %v366
  %v385 = vpack.c.b16 %v369, %v368
  %402 = vmatpush.bf16.msra.mxu0 %v377
  %403 = vmatpush.bf16.msra.mxu0 %v376
  %404 = vmatpush.bf16.msra.mxu0 %v375
  %405 = vmatpush.bf16.msra.mxu0 %v374
  %406 = vmatpush.bf16.msra.mxu0 %v373
  %407 = vmatpush.bf16.msra.mxu0 %v372
  %408 = vmatpush.bf16.msra.mxu0 %v371
  %409 = vmatpush.bf16.msra.mxu0 %v370
  %410 = vmatmul.bf16.gmra.mxu0 %v242
  %v411 = vpop.f32.mrf.mxu0
  %v412 = vadd.f32 0.0, %v411
  %v413 = vpop.f32.mrf.mxu0
  %v414 = vadd.f32 0.0, %v413
  %415 = vmatmul.bf16.gmra.mxu0 %v244
  %v416 = vpop.f32.mrf.mxu0
  %v417 = vadd.f32 0.0, %v416
  %v418 = vpop.f32.mrf.mxu0
  %v419 = vadd.f32 0.0, %v418
  %420 = vmatmul.bf16.gmra.mxu0 %v246
  %v421 = vpop.f32.mrf.mxu0
  %v422 = vadd.f32 0.0, %v421
  %v423 = vpop.f32.mrf.mxu0
  %v424 = vadd.f32 0.0, %v423
  %425 = vmatmul.bf16.gmra.mxu0 %v248
  %v426 = vpop.f32.mrf.mxu0
  %v427 = vadd.f32 0.0, %v426
  %v428 = vpop.f32.mrf.mxu0
  %v429 = vadd.f32 0.0, %v428
  %430 = vmatmul.bf16.gmra.mxu0 %v250
  %v431 = vpop.f32.mrf.mxu0
  %v432 = vadd.f32 0.0, %v431
  %v433 = vpop.f32.mrf.mxu0
  %v434 = vadd.f32 0.0, %v433
  %435 = vmatmul.bf16.gmra.mxu0 %v252
  %v436 = vpop.f32.mrf.mxu0
  %v437 = vadd.f32 0.0, %v436
  %v438 = vpop.f32.mrf.mxu0
  %v439 = vadd.f32 0.0, %v438
  %440 = vmatmul.bf16.gmra.mxu0 %v254
  %v441 = vpop.f32.mrf.mxu0
  %v442 = vadd.f32 0.0, %v441
  %v443 = vpop.f32.mrf.mxu0
  %v444 = vadd.f32 0.0, %v443
  %445 = vmatmul.bf16.gmra.mxu0 %v256
  %v446 = vpop.f32.mrf.mxu0
  %v447 = vadd.f32 0.0, %v446
  %v448 = vpop.f32.mrf.mxu0
  %v449 = vadd.f32 0.0, %v448
  %450 = vmatmul.bf16.gmra.mxu0 %v258
  %v451 = vpop.f32.mrf.mxu0
  %v452 = vadd.f32 0.0, %v451
  %v453 = vpop.f32.mrf.mxu0
  %v454 = vadd.f32 0.0, %v453
  %455 = vmatmul.bf16.gmra.mxu0 %v260
  %v456 = vpop.f32.mrf.mxu0
  %v457 = vadd.f32 0.0, %v456
  %v458 = vpop.f32.mrf.mxu0
  %v459 = vadd.f32 0.0, %v458
  %460 = vmatmul.bf16.gmra.mxu0 %v262
  %v461 = vpop.f32.mrf.mxu0
  %v462 = vadd.f32 0.0, %v461
  %v463 = vpop.f32.mrf.mxu0
  %v464 = vadd.f32 0.0, %v463
  %465 = vmatmul.bf16.gmra.mxu0 %v264
  %v466 = vpop.f32.mrf.mxu0
  %v467 = vadd.f32 0.0, %v466
  %v468 = vpop.f32.mrf.mxu0
  %v469 = vadd.f32 0.0, %v468
  %470 = vmatmul.bf16.gmra.mxu0 %v266
  %v471 = vpop.f32.mrf.mxu0
  %v472 = vadd.f32 0.0, %v471
  %v473 = vpop.f32.mrf.mxu0
  %v474 = vadd.f32 0.0, %v473
  %475 = vmatmul.bf16.gmra.mxu0 %v268
  %v476 = vpop.f32.mrf.mxu0
  %v477 = vadd.f32 0.0, %v476
  %v478 = vpop.f32.mrf.mxu0
  %v479 = vadd.f32 0.0, %v478
  %480 = vmatmul.bf16.gmra.mxu0 %v270
  %v481 = vpop.f32.mrf.mxu0
  %v482 = vadd.f32 0.0, %v481
  %v483 = vpop.f32.mrf.mxu0
  %v484 = vadd.f32 0.0, %v483
  %485 = vmatmul.bf16.gmra.mxu0 %v272
  %v486 = vpop.f32.mrf.mxu0
  %v487 = vadd.f32 0.0, %v486
  %v488 = vpop.f32.mrf.mxu0
  %v489 = vadd.f32 0.0, %v488
  %490 = vdwg.mxu0
  %491 = vmatpush.bf16.msra.mxu0 %v385
  %492 = vmatpush.bf16.msra.mxu0 %v384
  %493 = vmatpush.bf16.msra.mxu0 %v383
  %494 = vmatpush.bf16.msra.mxu0 %v382
  %495 = vmatpush.bf16.msra.mxu0 %v381
  %496 = vmatpush.bf16.msra.mxu0 %v380
  %497 = vmatpush.bf16.msra.mxu0 %v379
  %498 = vmatpush.bf16.msra.mxu0 %v378
  %499 = vmatmul.bf16.gmra.mxu0 %v243
  %v500 = vpop.f32.mrf.mxu0
  %v501 = vadd.f32 %v412, %v500
  %v502 = vpop.f32.mrf.mxu0
  %v503 = vadd.f32 %v414, %v502
  %504 = vmatmul.bf16.gmra.mxu0 %v245
  %v505 = vpop.f32.mrf.mxu0
  %v506 = vadd.f32 %v417, %v505
  %v507 = vpop.f32.mrf.mxu0
  %v508 = vadd.f32 %v419, %v507
  %509 = vmatmul.bf16.gmra.mxu0 %v247
  %v510 = vpop.f32.mrf.mxu0
  %v511 = vadd.f32 %v422, %v510
  %v512 = vpop.f32.mrf.mxu0
  %v513 = vadd.f32 %v424, %v512
  %514 = vmatmul.bf16.gmra.mxu0 %v249
  %v515 = vpop.f32.mrf.mxu0
  %v516 = vadd.f32 %v427, %v515
  %v517 = vpop.f32.mrf.mxu0
  %v518 = vadd.f32 %v429, %v517
  %519 = vmatmul.bf16.gmra.mxu0 %v251
  %v520 = vpop.f32.mrf.mxu0
  %v521 = vadd.f32 %v432, %v520
  %v522 = vpop.f32.mrf.mxu0
  %v523 = vadd.f32 %v434, %v522
  %524 = vmatmul.bf16.gmra.mxu0 %v253
  %v525 = vpop.f32.mrf.mxu0
  %v526 = vadd.f32 %v437, %v525
  %v527 = vpop.f32.mrf.mxu0
  %v528 = vadd.f32 %v439, %v527
  %529 = vmatmul.bf16.gmra.mxu0 %v255
  %v530 = vpop.f32.mrf.mxu0
  %v531 = vadd.f32 %v442, %v530
  %v532 = vpop.f32.mrf.mxu0
  %v533 = vadd.f32 %v444, %v532
  %534 = vmatmul.bf16.gmra.mxu0 %v257
  %v535 = vpop.f32.mrf.mxu0
  %v536 = vadd.f32 %v447, %v535
  %v537 = vpop.f32.mrf.mxu0
  %v538 = vadd.f32 %v449, %v537
  %539 = vmatmul.bf16.gmra.mxu0 %v259
  %v540 = vpop.f32.mrf.mxu0
  %v541 = vadd.f32 %v452, %v540
  %v542 = vpop.f32.mrf.mxu0
  %v543 = vadd.f32 %v454, %v542
  %544 = vmatmul.bf16.gmra.mxu0 %v261
  %v545 = vpop.f32.mrf.mxu0
  %v546 = vadd.f32 %v457, %v545
  %v547 = vpop.f32.mrf.mxu0
  %v548 = vadd.f32 %v459, %v547
  %549 = vmatmul.bf16.gmra.mxu0 %v263
  %v550 = vpop.f32.mrf.mxu0
  %v551 = vadd.f32 %v462, %v550
  %v552 = vpop.f32.mrf.mxu0
  %v553 = vadd.f32 %v464, %v552
  %554 = vmatmul.bf16.gmra.mxu0 %v265
  %v555 = vpop.f32.mrf.mxu0
  %v556 = vadd.f32 %v467, %v555
  %v557 = vpop.f32.mrf.mxu0
  %v558 = vadd.f32 %v469, %v557
  %559 = vmatmul.bf16.gmra.mxu0 %v267
  %v560 = vpop.f32.mrf.mxu0
  %v561 = vadd.f32 %v472, %v560
  %v562 = vpop.f32.mrf.mxu0
  %v563 = vadd.f32 %v474, %v562
  %564 = vmatmul.bf16.gmra.mxu0 %v269
  %v565 = vpop.f32.mrf.mxu0
  %v566 = vadd.f32 %v477, %v565
  %v567 = vpop.f32.mrf.mxu0
  %v568 = vadd.f32 %v479, %v567
  %569 = vmatmul.bf16.gmra.mxu0 %v271
  %v570 = vpop.f32.mrf.mxu0
  %v571 = vadd.f32 %v482, %v570
  %v572 = vpop.f32.mrf.mxu0
  %v573 = vadd.f32 %v484, %v572
  %574 = vmatmul.bf16.gmra.mxu0 %v273
  %v575 = vpop.f32.mrf.mxu0
  %v576 = vadd.f32 %v487, %v575
  %v577 = vpop.f32.mrf.mxu0
  %v578 = vadd.f32 %v489, %v577
  %579 = vdwg.mxu0
  %v580 = vadd.f32 %v50, %v501
  %v581 = vadd.f32 %v51, %v503
  %v582 = vadd.f32 %v52, %v506
  %v583 = vadd.f32 %v53, %v508
  %v584 = vadd.f32 %v54, %v511
  %v585 = vadd.f32 %v55, %v513
  %v586 = vadd.f32 %v56, %v516
  %v587 = vadd.f32 %v57, %v518
  %v588 = vadd.f32 %v58, %v521
  %v589 = vadd.f32 %v59, %v523
  %v590 = vadd.f32 %v60, %v526
  %v591 = vadd.f32 %v61, %v528
  %v592 = vadd.f32 %v62, %v531
  %v593 = vadd.f32 %v63, %v533
  %v594 = vadd.f32 %v64, %v536
  %v595 = vadd.f32 %v65, %v538
  %v596 = vadd.f32 %v66, %v541
  %v597 = vadd.f32 %v67, %v543
  %v598 = vadd.f32 %v68, %v546
  %v599 = vadd.f32 %v69, %v548
  %v600 = vadd.f32 %v70, %v551
  %v601 = vadd.f32 %v71, %v553
  %v602 = vadd.f32 %v72, %v556
  %v603 = vadd.f32 %v73, %v558
  %v604 = vadd.f32 %v74, %v561
  %v605 = vadd.f32 %v75, %v563
  %v606 = vadd.f32 %v76, %v566
  %v607 = vadd.f32 %v77, %v568
  %v608 = vadd.f32 %v78, %v571
  %v609 = vadd.f32 %v79, %v573
  %v610 = vadd.f32 %v80, %v576
  %v611 = vadd.f32 %v81, %v578
  %612 = vst [vmem:[#allocation2] sm:$0xff] %v580
  %613 = vst [vmem:[#allocation2 + $0x8] sm:$0xff] %v581
  %614 = vst [vmem:[#allocation2 + $0x10] sm:$0xff] %v582
  %615 = vst [vmem:[#allocation2 + $0x18] sm:$0xff] %v583
  %616 = vst [vmem:[#allocation2 + $0x20] sm:$0xff] %v584
  %617 = vst [vmem:[#allocation2 + $0x28] sm:$0xff] %v585
  %618 = vst [vmem:[#allocation2 + $0x30] sm:$0xff] %v586
  %619 = vst [vmem:[#allocation2 + $0x38] sm:$0xff] %v587
  %620 = vst [vmem:[#allocation2 + $0x40] sm:$0xff] %v588
  %621 = vst [vmem:[#allocation2 + $0x48] sm:$0xff] %v589
  %622 = vst [vmem:[#allocation2 + $0x50] sm:$0xff] %v590
  %623 = vst [vmem:[#allocation2 + $0x58] sm:$0xff] %v591
  %624 = vst [vmem:[#allocation2 + $0x60] sm:$0xff] %v592
  %625 = vst [vmem:[#allocation2 + $0x68] sm:$0xff] %v593
  %626 = vst [vmem:[#allocation2 + $0x70] sm:$0xff] %v594
  %627 = vst [vmem:[#allocation2 + $0x78] sm:$0xff] %v595
  %628 = vst [vmem:[#allocation2 + $0x80] sm:$0xff] %v596
  %629 = vst [vmem:[#allocation2 + $0x88] sm:$0xff] %v597
  %630 = vst [vmem:[#allocation2 + $0x90] sm:$0xff] %v598
  %631 = vst [vmem:[#allocation2 + $0x98] sm:$0xff] %v599
  %632 = vst [vmem:[#allocation2 + $0xa0] sm:$0xff] %v600
  %633 = vst [vmem:[#allocation2 + $0xa8] sm:$0xff] %v601
  %634 = vst [vmem:[#allocation2 + $0xb0] sm:$0xff] %v602
  %635 = vst [vmem:[#allocation2 + $0xb8] sm:$0xff] %v603
  %636 = vst [vmem:[#allocation2 + $0xc0] sm:$0xff] %v604
  %637 = vst [vmem:[#allocation2 + $0xc8] sm:$0xff] %v605
  %638 = vst [vmem:[#allocation2 + $0xd0] sm:$0xff] %v606
  %639 = vst [vmem:[#allocation2 + $0xd8] sm:$0xff] %v607
  %640 = vst [vmem:[#allocation2 + $0xe0] sm:$0xff] %v608
  %641 = vst [vmem:[#allocation2 + $0xe8] sm:$0xff] %v609
  %642 = vst [vmem:[#allocation2 + $0xf0] sm:$0xff] %v610
  %643 = vst [vmem:[#allocation2 + $0xf8] sm:$0xff] %v611
  // Predicated region
  $region18: #{net_forward.7} parent=0 // pred_check
    %p644 = pneg %p14
  $region19: #{net_forward.7} parent=0 // pred_check_branch
    %646 = sbr.rel (%p644) target = $region21
  $region20: #{net_forward.7} parent=0 // pred_region
    %v647 = vld [vmem:[#allocation2] sm:$0xff]
    %v648 = vld [vmem:[#allocation2 + $0x8] sm:$0xff]
    %v649 = vld [vmem:[#allocation2 + $0x10] sm:$0xff]
    %v650 = vld [vmem:[#allocation2 + $0x18] sm:$0xff]
    %v651 = vld [vmem:[#allocation2 + $0x20] sm:$0xff]
    %v652 = vld [vmem:[#allocation2 + $0x28] sm:$0xff]
    %v653 = vld [vmem:[#allocation2 + $0x30] sm:$0xff]
    %v654 = vld [vmem:[#allocation2 + $0x38] sm:$0xff]
    %v655 = vld [vmem:[#allocation2 + $0x40] sm:$0xff]
    %v656 = vld [vmem:[#allocation2 + $0x48] sm:$0xff]
    %v657 = vld [vmem:[#allocation2 + $0x50] sm:$0xff]
    %v658 = vld [vmem:[#allocation2 + $0x58] sm:$0xff]
    %v659 = vld [vmem:[#allocation2 + $0x60] sm:$0xff]
    %v660 = vld [vmem:[#allocation2 + $0x68] sm:$0xff]
    %v661 = vld [vmem:[#allocation2 + $0x70] sm:$0xff]
    %v662 = vld [vmem:[#allocation2 + $0x78] sm:$0xff]
    %v663 = vld [vmem:[#allocation2 + $0x80] sm:$0xff]
    %v664 = vld [vmem:[#allocation2 + $0x88] sm:$0xff]
    %v665 = vld [vmem:[#allocation2 + $0x90] sm:$0xff]
    %v666 = vld [vmem:[#allocation2 + $0x98] sm:$0xff]
    %v667 = vld [vmem:[#allocation2 + $0xa0] sm:$0xff]
    %v668 = vld [vmem:[#allocation2 + $0xa8] sm:$0xff]
    %v669 = vld [vmem:[#allocation2 + $0xb0] sm:$0xff]
    %v670 = vld [vmem:[#allocation2 + $0xb8] sm:$0xff]
    %v671 = vld [vmem:[#allocation2 + $0xc0] sm:$0xff]
    %v672 = vld [vmem:[#allocation2 + $0xc8] sm:$0xff]
    %v673 = vld [vmem:[#allocation2 + $0xd0] sm:$0xff]
    %v674 = vld [vmem:[#allocation2 + $0xd8] sm:$0xff]
    %v675 = vld [vmem:[#allocation2 + $0xe0] sm:$0xff]
    %v676 = vld [vmem:[#allocation2 + $0xe8] sm:$0xff]
    %v677 = vld [vmem:[#allocation2 + $0xf0] sm:$0xff]
    %v678 = vld [vmem:[#allocation2 + $0xf8] sm:$0xff]
    %v679 = vld [vmem:[%s2] sm:$0xff]
    %v680 = vld [vmem:[%s2 + $0x8] sm:$0xff]
    %v681 = vld [vmem:[%s2 + $0x10] sm:$0xff]
    %v682 = vld [vmem:[%s2 + $0x18] sm:$0xff]
    %v683 = vld [vmem:[%s2 + $0x20] sm:$0xff]
    %v684 = vld [vmem:[%s2 + $0x28] sm:$0xff]
    %v685 = vld [vmem:[%s2 + $0x30] sm:$0xff]
    %v686 = vld [vmem:[%s2 + $0x38] sm:$0xff]
    %v687 = vld [vmem:[%s2 + $0x40] sm:$0xff]
    %v688 = vld [vmem:[%s2 + $0x48] sm:$0xff]
    %v689 = vld [vmem:[%s2 + $0x50] sm:$0xff]
    %v690 = vld [vmem:[%s2 + $0x58] sm:$0xff]
    %v691 = vld [vmem:[%s2 + $0x60] sm:$0xff]
    %v692 = vld [vmem:[%s2 + $0x68] sm:$0xff]
    %v693 = vld [vmem:[%s2 + $0x70] sm:$0xff]
    %v694 = vld [vmem:[%s2 + $0x78] sm:$0xff]
    %v695 = vld [vmem:[%s2 + $0x80] sm:$0xff]
    %v696 = vld [vmem:[%s2 + $0x88] sm:$0xff]
    %v697 = vld [vmem:[%s2 + $0x90] sm:$0xff]
    %v698 = vld [vmem:[%s2 + $0x98] sm:$0xff]
    %v699 = vld [vmem:[%s2 + $0xa0] sm:$0xff]
    %v700 = vld [vmem:[%s2 + $0xa8] sm:$0xff]
    %v701 = vld [vmem:[%s2 + $0xb0] sm:$0xff]
    %v702 = vld [vmem:[%s2 + $0xb8] sm:$0xff]
    %v703 = vld [vmem:[%s2 + $0xc0] sm:$0xff]
    %v704 = vld [vmem:[%s2 + $0xc8] sm:$0xff]
    %v705 = vld [vmem:[%s2 + $0xd0] sm:$0xff]
    %v706 = vld [vmem:[%s2 + $0xd8] sm:$0xff]
    %v707 = vld [vmem:[%s2 + $0xe0] sm:$0xff]
    %v708 = vld [vmem:[%s2 + $0xe8] sm:$0xff]
    %v709 = vld [vmem:[%s2 + $0xf0] sm:$0xff]
    %v710 = vld [vmem:[%s2 + $0xf8] sm:$0xff]
    %v711 = vadd.f32 %v647, %v679
    %v712 = vadd.f32 %v648, %v680
    %v713 = vadd.f32 %v649, %v681
    %v714 = vadd.f32 %v650, %v682
    %v715 = vadd.f32 %v651, %v683
    %v716 = vadd.f32 %v652, %v684
    %v717 = vadd.f32 %v653, %v685
    %v718 = vadd.f32 %v654, %v686
    %v719 = vadd.f32 %v655, %v687
    %v720 = vadd.f32 %v656, %v688
    %v721 = vadd.f32 %v657, %v689
    %v722 = vadd.f32 %v658, %v690
    %v723 = vadd.f32 %v659, %v691
    %v724 = vadd.f32 %v660, %v692
    %v725 = vadd.f32 %v661, %v693
    %v726 = vadd.f32 %v662, %v694
    %v727 = vadd.f32 %v663, %v695
    %v728 = vadd.f32 %v664, %v696
    %v729 = vadd.f32 %v665, %v697
    %v730 = vadd.f32 %v666, %v698
    %v731 = vadd.f32 %v667, %v699
    %v732 = vadd.f32 %v668, %v700
    %v733 = vadd.f32 %v669, %v701
    %v734 = vadd.f32 %v670, %v702
    %v735 = vadd.f32 %v671, %v703
    %v736 = vadd.f32 %v672, %v704
    %v737 = vadd.f32 %v673, %v705
    %v738 = vadd.f32 %v674, %v706
    %v739 = vadd.f32 %v675, %v707
    %v740 = vadd.f32 %v676, %v708
    %v741 = vadd.f32 %v677, %v709
    %v742 = vadd.f32 %v678, %v710
    %v743 = vlaneseq
    %v744 = vand.u32 %v743, 127
    %vm745 = vcmp.lt.s32.totalorder %v744, 8
    %v746 = vsel %vm745, %v711, -inf
    %v747 = vsel %vm745, %v712, -inf
    %v748 = vsel %vm745, %v713, -inf
    %v749 = vsel %vm745, %v714, -inf
    %v750 = vsel %vm745, %v715, -inf
    %v751 = vsel %vm745, %v716, -inf
    %v752 = vsel %vm745, %v717, -inf
    %v753 = vsel %vm745, %v718, -inf
    %v754 = vsel %vm745, %v719, -inf
    %v755 = vsel %vm745, %v720, -inf
    %v756 = vsel %vm745, %v721, -inf
    %v757 = vsel %vm745, %v722, -inf
    %v758 = vsel %vm745, %v723, -inf
    %v759 = vsel %vm745, %v724, -inf
    %v760 = vsel %vm745, %v725, -inf
    %v761 = vsel %vm745, %v726, -inf
    %v762 = vsel %vm745, %v727, -inf
    %v763 = vsel %vm745, %v728, -inf
    %v764 = vsel %vm745, %v729, -inf
    %v765 = vsel %vm745, %v730, -inf
    %v766 = vsel %vm745, %v731, -inf
    %v767 = vsel %vm745, %v732, -inf
    %v768 = vsel %vm745, %v733, -inf
    %v769 = vsel %vm745, %v734, -inf
    %v770 = vsel %vm745, %v735, -inf
    %v771 = vsel %vm745, %v736, -inf
    %v772 = vsel %vm745, %v737, -inf
    %v773 = vsel %vm745, %v738, -inf
    %v774 = vsel %vm745, %v739, -inf
    %v775 = vsel %vm745, %v740, -inf
    %v776 = vsel %vm745, %v741, -inf
    %v777 = vsel %vm745, %v742, -inf
    %778 = vmax.xlane.f32.xlu0 %v746
    %v779 = vpop.xlane.xlu0 %778
    %780 = vmax.xlane.f32.xlu0 %v747
    %v781 = vpop.xlane.xlu0 %780
    %782 = vmax.xlane.f32.xlu0 %v748
    %v783 = vpop.xlane.xlu0 %782
    %784 = vmax.xlane.f32.xlu0 %v749
    %v785 = vpop.xlane.xlu0 %784
    %786 = vmax.xlane.f32.xlu0 %v750
    %v787 = vpop.xlane.xlu0 %786
    %788 = vmax.xlane.f32.xlu0 %v751
    %v789 = vpop.xlane.xlu0 %788
    %790 = vmax.xlane.f32.xlu0 %v752
    %v791 = vpop.xlane.xlu0 %790
    %792 = vmax.xlane.f32.xlu0 %v753
    %v793 = vpop.xlane.xlu0 %792
    %794 = vmax.xlane.f32.xlu0 %v754
    %v795 = vpop.xlane.xlu0 %794
    %796 = vmax.xlane.f32.xlu0 %v755
    %v797 = vpop.xlane.xlu0 %796
    %798 = vmax.xlane.f32.xlu0 %v756
    %v799 = vpop.xlane.xlu0 %798
    %800 = vmax.xlane.f32.xlu0 %v757
    %v801 = vpop.xlane.xlu0 %800
    %802 = vmax.xlane.f32.xlu0 %v758
    %v803 = vpop.xlane.xlu0 %802
    %804 = vmax.xlane.f32.xlu0 %v759
    %v805 = vpop.xlane.xlu0 %804
    %806 = vmax.xlane.f32.xlu0 %v760
    %v807 = vpop.xlane.xlu0 %806
    %808 = vmax.xlane.f32.xlu0 %v761
    %v809 = vpop.xlane.xlu0 %808
    %810 = vmax.xlane.f32.xlu0 %v762
    %v811 = vpop.xlane.xlu0 %810
    %812 = vmax.xlane.f32.xlu0 %v763
    %v813 = vpop.xlane.xlu0 %812
    %814 = vmax.xlane.f32.xlu0 %v764
    %v815 = vpop.xlane.xlu0 %814
    %816 = vmax.xlane.f32.xlu0 %v765
    %v817 = vpop.xlane.xlu0 %816
    %818 = vmax.xlane.f32.xlu0 %v766
    %v819 = vpop.xlane.xlu0 %818
    %820 = vmax.xlane.f32.xlu0 %v767
    %v821 = vpop.xlane.xlu0 %820
    %822 = vmax.xlane.f32.xlu0 %v768
    %v823 = vpop.xlane.xlu0 %822
    %824 = vmax.xlane.f32.xlu0 %v769
    %v825 = vpop.xlane.xlu0 %824
    %826 = vmax.xlane.f32.xlu0 %v770
    %v827 = vpop.xlane.xlu0 %826
    %828 = vmax.xlane.f32.xlu0 %v771
    %v829 = vpop.xlane.xlu0 %828
    %830 = vmax.xlane.f32.xlu0 %v772
    %v831 = vpop.xlane.xlu0 %830
    %832 = vmax.xlane.f32.xlu0 %v773
    %v833 = vpop.xlane.xlu0 %832
    %834 = vmax.xlane.f32.xlu0 %v774
    %v835 = vpop.xlane.xlu0 %834
    %836 = vmax.xlane.f32.xlu0 %v775
    %v837 = vpop.xlane.xlu0 %836
    %838 = vmax.xlane.f32.xlu0 %v776
    %v839 = vpop.xlane.xlu0 %838
    %840 = vmax.xlane.f32.xlu0 %v777
    %v841 = vpop.xlane.xlu0 %840
    %v842 = vsub.f32 %v746, %v779
    %v843 = vsub.f32 %v747, %v781
    %v844 = vsub.f32 %v748, %v783
    %v845 = vsub.f32 %v749, %v785
    %v846 = vsub.f32 %v750, %v787
    %v847 = vsub.f32 %v751, %v789
    %v848 = vsub.f32 %v752, %v791
    %v849 = vsub.f32 %v753, %v793
    %v850 = vsub.f32 %v754, %v795
    %v851 = vsub.f32 %v755, %v797
    %v852 = vsub.f32 %v756, %v799
    %v853 = vsub.f32 %v757, %v801
    %v854 = vsub.f32 %v758, %v803
    %v855 = vsub.f32 %v759, %v805
    %v856 = vsub.f32 %v760, %v807
    %v857 = vsub.f32 %v761, %v809
    %v858 = vsub.f32 %v762, %v811
    %v859 = vsub.f32 %v763, %v813
    %v860 = vsub.f32 %v764, %v815
    %v861 = vsub.f32 %v765, %v817
    %v862 = vsub.f32 %v766, %v819
    %v863 = vsub.f32 %v767, %v821
    %v864 = vsub.f32 %v768, %v823
    %v865 = vsub.f32 %v769, %v825
    %v866 = vsub.f32 %v770, %v827
    %v867 = vsub.f32 %v771, %v829
    %v868 = vsub.f32 %v772, %v831
    %v869 = vsub.f32 %v773, %v833
    %v870 = vsub.f32 %v774, %v835
    %v871 = vsub.f32 %v775, %v837
    %v872 = vsub.f32 %v776, %v839
    %v873 = vsub.f32 %v777, %v841
    %v874 = vmul.f32 %v842, 1.442695
    %v875 = vpow.pop %v874
    %v876 = vmul.f32 %v843, 1.442695
    %v877 = vpow.pop %v876
    %v878 = vmul.f32 %v844, 1.442695
    %v879 = vpow.pop %v878
    %v880 = vmul.f32 %v845, 1.442695
    %v881 = vpow.pop %v880
    %v882 = vmul.f32 %v846, 1.442695
    %v883 = vpow.pop %v882
    %v884 = vmul.f32 %v847, 1.442695
    %v885 = vpow.pop %v884
    %v886 = vmul.f32 %v848, 1.442695
    %v887 = vpow.pop %v886
    %v888 = vmul.f32 %v849, 1.442695
    %v889 = vpow.pop %v888
    %v890 = vmul.f32 %v850, 1.442695
    %v891 = vpow.pop %v890
    %v892 = vmul.f32 %v851, 1.442695
    %v893 = vpow.pop %v892
    %v894 = vmul.f32 %v852, 1.442695
    %v895 = vpow.pop %v894
    %v896 = vmul.f32 %v853, 1.442695
    %v897 = vpow.pop %v896
    %v898 = vmul.f32 %v854, 1.442695
    %v899 = vpow.pop %v898
    %v900 = vmul.f32 %v855, 1.442695
    %v901 = vpow.pop %v900
    %v902 = vmul.f32 %v856, 1.442695
    %v903 = vpow.pop %v902
    %v904 = vmul.f32 %v857, 1.442695
    %v905 = vpow.pop %v904
    %v906 = vmul.f32 %v858, 1.442695
    %v907 = vpow.pop %v906
    %v908 = vmul.f32 %v859, 1.442695
    %v909 = vpow.pop %v908
    %v910 = vmul.f32 %v860, 1.442695
    %v911 = vpow.pop %v910
    %v912 = vmul.f32 %v861, 1.442695
    %v913 = vpow.pop %v912
    %v914 = vmul.f32 %v862, 1.442695
    %v915 = vpow.pop %v914
    %v916 = vmul.f32 %v863, 1.442695
    %v917 = vpow.pop %v916
    %v918 = vmul.f32 %v864, 1.442695
    %v919 = vpow.pop %v918
    %v920 = vmul.f32 %v865, 1.442695
    %v921 = vpow.pop %v920
    %v922 = vmul.f32 %v866, 1.442695
    %v923 = vpow.pop %v922
    %v924 = vmul.f32 %v867, 1.442695
    %v925 = vpow.pop %v924
    %v926 = vmul.f32 %v868, 1.442695
    %v927 = vpow.pop %v926
    %v928 = vmul.f32 %v869, 1.442695
    %v929 = vpow.pop %v928
    %v930 = vmul.f32 %v870, 1.442695
    %v931 = vpow.pop %v930
    %v932 = vmul.f32 %v871, 1.442695
    %v933 = vpow.pop %v932
    %v934 = vmul.f32 %v872, 1.442695
    %v935 = vpow.pop %v934
    %v936 = vmul.f32 %v873, 1.442695
    %v937 = vpow.pop %v936
    %938 = vadd.xlane.f32.xlu0 %v875
    %v939 = vpop.xlane.xlu0 %938
    %940 = vadd.xlane.f32.xlu0 %v877
    %v941 = vpop.xlane.xlu0 %940
    %942 = vadd.xlane.f32.xlu0 %v879
    %v943 = vpop.xlane.xlu0 %942
    %944 = vadd.xlane.f32.xlu0 %v881
    %v945 = vpop.xlane.xlu0 %944
    %946 = vadd.xlane.f32.xlu0 %v883
    %v947 = vpop.xlane.xlu0 %946
    %948 = vadd.xlane.f32.xlu0 %v885
    %v949 = vpop.xlane.xlu0 %948
    %950 = vadd.xlane.f32.xlu0 %v887
    %v951 = vpop.xlane.xlu0 %950
    %952 = vadd.xlane.f32.xlu0 %v889
    %v953 = vpop.xlane.xlu0 %952
    %954 = vadd.xlane.f32.xlu0 %v891
    %v955 = vpop.xlane.xlu0 %954
    %956 = vadd.xlane.f32.xlu0 %v893
    %v957 = vpop.xlane.xlu0 %956
    %958 = vadd.xlane.f32.xlu0 %v895
    %v959 = vpop.xlane.xlu0 %958
    %960 = vadd.xlane.f32.xlu0 %v897
    %v961 = vpop.xlane.xlu0 %960
    %962 = vadd.xlane.f32.xlu0 %v899
    %v963 = vpop.xlane.xlu0 %962
    %964 = vadd.xlane.f32.xlu0 %v901
    %v965 = vpop.xlane.xlu0 %964
    %966 = vadd.xlane.f32.xlu0 %v903
    %v967 = vpop.xlane.xlu0 %966
    %968 = vadd.xlane.f32.xlu0 %v905
    %v969 = vpop.xlane.xlu0 %968
    %970 = vadd.xlane.f32.xlu0 %v907
    %v971 = vpop.xlane.xlu0 %970
    %972 = vadd.xlane.f32.xlu0 %v909
    %v973 = vpop.xlane.xlu0 %972
    %974 = vadd.xlane.f32.xlu0 %v911
    %v975 = vpop.xlane.xlu0 %974
    %976 = vadd.xlane.f32.xlu0 %v913
    %v977 = vpop.xlane.xlu0 %976
    %978 = vadd.xlane.f32.xlu0 %v915
    %v979 = vpop.xlane.xlu0 %978
    %980 = vadd.xlane.f32.xlu0 %v917
    %v981 = vpop.xlane.xlu0 %980
    %982 = vadd.xlane.f32.xlu0 %v919
    %v983 = vpop.xlane.xlu0 %982
    %984 = vadd.xlane.f32.xlu0 %v921
    %v985 = vpop.xlane.xlu0 %984
    %986 = vadd.xlane.f32.xlu0 %v923
    %v987 = vpop.xlane.xlu0 %986
    %988 = vadd.xlane.f32.xlu0 %v925
    %v989 = vpop.xlane.xlu0 %988
    %990 = vadd.xlane.f32.xlu0 %v927
    %v991 = vpop.xlane.xlu0 %990
    %992 = vadd.xlane.f32.xlu0 %v929
    %v993 = vpop.xlane.xlu0 %992
    %994 = vadd.xlane.f32.xlu0 %v931
    %v995 = vpop.xlane.xlu0 %994
    %996 = vadd.xlane.f32.xlu0 %v933
    %v997 = vpop.xlane.xlu0 %996
    %998 = vadd.xlane.f32.xlu0 %v935
    %v999 = vpop.xlane.xlu0 %998
    %1000 = vadd.xlane.f32.xlu0 %v937
    %v1001 = vpop.xlane.xlu0 %1000
    %v1002 = vlog2.pop %v939
    %v1003 = vmul.f32 %v1002, 0.6931472
    %v1004 = vlog2.pop %v941
    %v1005 = vmul.f32 %v1004, 0.6931472
    %v1006 = vlog2.pop %v943
    %v1007 = vmul.f32 %v1006, 0.6931472
    %v1008 = vlog2.pop %v945
    %v1009 = vmul.f32 %v1008, 0.6931472
    %v1010 = vlog2.pop %v947
    %v1011 = vmul.f32 %v1010, 0.6931472
    %v1012 = vlog2.pop %v949
    %v1013 = vmul.f32 %v1012, 0.6931472
    %v1014 = vlog2.pop %v951
    %v1015 = vmul.f32 %v1014, 0.6931472
    %v1016 = vlog2.pop %v953
    %v1017 = vmul.f32 %v1016, 0.6931472
    %v1018 = vlog2.pop %v955
    %v1019 = vmul.f32 %v1018, 0.6931472
    %v1020 = vlog2.pop %v957
    %v1021 = vmul.f32 %v1020, 0.6931472
    %v1022 = vlog2.pop %v959
    %v1023 = vmul.f32 %v1022, 0.6931472
    %v1024 = vlog2.pop %v961
    %v1025 = vmul.f32 %v1024, 0.6931472
    %v1026 = vlog2.pop %v963
    %v1027 = vmul.f32 %v1026, 0.6931472
    %v1028 = vlog2.pop %v965
    %v1029 = vmul.f32 %v1028, 0.6931472
    %v1030 = vlog2.pop %v967
    %v1031 = vmul.f32 %v1030, 0.6931472
    %v1032 = vlog2.pop %v969
    %v1033 = vmul.f32 %v1032, 0.6931472
    %v1034 = vlog2.pop %v971
    %v1035 = vmul.f32 %v1034, 0.6931472
    %v1036 = vlog2.pop %v973
    %v1037 = vmul.f32 %v1036, 0.6931472
    %v1038 = vlog2.pop %v975
    %v1039 = vmul.f32 %v1038, 0.6931472
    %v1040 = vlog2.pop %v977
    %v1041 = vmul.f32 %v1040, 0.6931472
    %v1042 = vlog2.pop %v979
    %v1043 = vmul.f32 %v1042, 0.6931472
    %v1044 = vlog2.pop %v981
    %v1045 = vmul.f32 %v1044, 0.6931472
    %v1046 = vlog2.pop %v983
    %v1047 = vmul.f32 %v1046, 0.6931472
    %v1048 = vlog2.pop %v985
    %v1049 = vmul.f32 %v1048, 0.6931472
    %v1050 = vlog2.pop %v987
    %v1051 = vmul.f32 %v1050, 0.6931472
    %v1052 = vlog2.pop %v989
    %v1053 = vmul.f32 %v1052, 0.6931472
    %v1054 = vlog2.pop %v991
    %v1055 = vmul.f32 %v1054, 0.6931472
    %v1056 = vlog2.pop %v993
    %v1057 = vmul.f32 %v1056, 0.6931472
    %v1058 = vlog2.pop %v995
    %v1059 = vmul.f32 %v1058, 0.6931472
    %v1060 = vlog2.pop %v997
    %v1061 = vmul.f32 %v1060, 0.6931472
    %v1062 = vlog2.pop %v999
    %v1063 = vmul.f32 %v1062, 0.6931472
    %v1064 = vlog2.pop %v1001
    %v1065 = vmul.f32 %v1064, 0.6931472
    %v1066 = vsub.f32 %v842, %v1003
    %v1067 = vsub.f32 %v843, %v1005
    %v1068 = vsub.f32 %v844, %v1007
    %v1069 = vsub.f32 %v845, %v1009
    %v1070 = vsub.f32 %v846, %v1011
    %v1071 = vsub.f32 %v847, %v1013
    %v1072 = vsub.f32 %v848, %v1015
    %v1073 = vsub.f32 %v849, %v1017
    %v1074 = vsub.f32 %v850, %v1019
    %v1075 = vsub.f32 %v851, %v1021
    %v1076 = vsub.f32 %v852, %v1023
    %v1077 = vsub.f32 %v853, %v1025
    %v1078 = vsub.f32 %v854, %v1027
    %v1079 = vsub.f32 %v855, %v1029
    %v1080 = vsub.f32 %v856, %v1031
    %v1081 = vsub.f32 %v857, %v1033
    %v1082 = vsub.f32 %v858, %v1035
    %v1083 = vsub.f32 %v859, %v1037
    %v1084 = vsub.f32 %v860, %v1039
    %v1085 = vsub.f32 %v861, %v1041
    %v1086 = vsub.f32 %v862, %v1043
    %v1087 = vsub.f32 %v863, %v1045
    %v1088 = vsub.f32 %v864, %v1047
    %v1089 = vsub.f32 %v865, %v1049
    %v1090 = vsub.f32 %v866, %v1051
    %v1091 = vsub.f32 %v867, %v1053
    %v1092 = vsub.f32 %v868, %v1055
    %v1093 = vsub.f32 %v869, %v1057
    %v1094 = vsub.f32 %v870, %v1059
    %v1095 = vsub.f32 %v871, %v1061
    %v1096 = vsub.f32 %v872, %v1063
    %v1097 = vsub.f32 %v873, %v1065
    %1098 = vst [vmem:[%s3] sm:$0xff] %v1066
    %1099 = vst [vmem:[%s3 + $0x8] sm:$0xff] %v1067
    %1100 = vst [vmem:[%s3 + $0x10] sm:$0xff] %v1068
    %1101 = vst [vmem:[%s3 + $0x18] sm:$0xff] %v1069
    %1102 = vst [vmem:[%s3 + $0x20] sm:$0xff] %v1070
    %1103 = vst [vmem:[%s3 + $0x28] sm:$0xff] %v1071
    %1104 = vst [vmem:[%s3 + $0x30] sm:$0xff] %v1072
    %1105 = vst [vmem:[%s3 + $0x38] sm:$0xff] %v1073
    %1106 = vst [vmem:[%s3 + $0x40] sm:$0xff] %v1074
    %1107 = vst [vmem:[%s3 + $0x48] sm:$0xff] %v1075
    %1108 = vst [vmem:[%s3 + $0x50] sm:$0xff] %v1076
    %1109 = vst [vmem:[%s3 + $0x58] sm:$0xff] %v1077
    %1110 = vst [vmem:[%s3 + $0x60] sm:$0xff] %v1078
    %1111 = vst [vmem:[%s3 + $0x68] sm:$0xff] %v1079
    %1112 = vst [vmem:[%s3 + $0x70] sm:$0xff] %v1080
    %1113 = vst [vmem:[%s3 + $0x78] sm:$0xff] %v1081
    %1114 = vst [vmem:[%s3 + $0x80] sm:$0xff] %v1082
    %1115 = vst [vmem:[%s3 + $0x88] sm:$0xff] %v1083
    %1116 = vst [vmem:[%s3 + $0x90] sm:$0xff] %v1084
    %1117 = vst [vmem:[%s3 + $0x98] sm:$0xff] %v1085
    %1118 = vst [vmem:[%s3 + $0xa0] sm:$0xff] %v1086
    %1119 = vst [vmem:[%s3 + $0xa8] sm:$0xff] %v1087
    %1120 = vst [vmem:[%s3 + $0xb0] sm:$0xff] %v1088
    %1121 = vst [vmem:[%s3 + $0xb8] sm:$0xff] %v1089
    %1122 = vst [vmem:[%s3 + $0xc0] sm:$0xff] %v1090
    %1123 = vst [vmem:[%s3 + $0xc8] sm:$0xff] %v1091
    %1124 = vst [vmem:[%s3 + $0xd0] sm:$0xff] %v1092
    %1125 = vst [vmem:[%s3 + $0xd8] sm:$0xff] %v1093
    %1126 = vst [vmem:[%s3 + $0xe0] sm:$0xff] %v1094
    %1127 = vst [vmem:[%s3 + $0xe8] sm:$0xff] %v1095
    %1128 = vst [vmem:[%s3 + $0xf0] sm:$0xff] %v1096
    %1129 = vst [vmem:[%s3 + $0xf8] sm:$0xff] %v1097
  $region21: #{net_forward.7} parent=0 // pred_fallthru
    _
  // Predicated region
  $region22: #{net_forward.7} parent=0 // pred_check
    _
  $region23: #{net_forward.7} parent=0 // pred_check_branch
    %1131 = sbr.rel (0) target = $region25
  $region24: #{net_forward.7} parent=0 // pred_region
    _
  $region25: #{net_forward.7} parent=0 // pred_fallthru
    _
  // Predicated region
  $region26: #{net_forward.7} parent=0 // pred_check
    _
  $region27: #{net_forward.7} parent=0 // pred_check_branch
    %1133 = sbr.rel (0) target = $region29
  $region28: #{net_forward.7} parent=0 // pred_region
    _
  $region29: #{net_forward.7} parent=0 // pred_fallthru
    _

</llo_original>
